<compile_context>
chip_gen: v7x
topology: tpu7x:2x2x1
jax: 0.10.0
libtpu: 0.0.40
codegen_flags: <defaults>
</compile_context>

<pallas_src>
import jax
import jax.numpy as jnp
import numpy as np
from jax import lax
from jax.experimental import pallas as pl
from jax.experimental.pallas import tpu as pltpu

T_SOFTMAX = 0.07
DIS_THRESHOLD = 2.0
NORM_EPS = 1e-12


def _round_up(x, m):
    return ((x + m - 1) // m) * m


# --------------------------------------------------------------------------
# Kernel 1: fused 3x3 conv (in-kernel im2col, single matmul per tile)
#           + bias + channel-wise L2 normalize, channel-first lane-dense out
# --------------------------------------------------------------------------
def _conv_bias_norm_kernel(xp_ref, w_ref, b_ref, feat_ref, q_ref):
    # xp_ref : (H+2, W+2, Cin) bf16  zero-padded NHWC image, resident per n
    # w_ref  : (Cout, 9*Cin)   bf16  weights, K ordered (dy, dx, cin)
    # b_ref  : (Cout, 1)       f32
    # feat_ref, q_ref : (Cout, tile_h*W) f32  channel-first, lane-dense tiles
    cout, n_cols = feat_ref.shape
    w_out = xp_ref.shape[1] - 2
    cin = xp_ref.shape[2]
    tile_h = n_cols // w_out
    h0 = pl.program_id(1) * tile_h

    # In-kernel im2col: 9 shifted (tile_h*W, Cin) slabs concatenated along K.
    slabs = []
    for dy in range(3):
        rows = xp_ref[pl.ds(h0 + dy, tile_h), :, :]          # (tile_h, W+2, Cin)
        for dx in range(3):
            slabs.append(rows[:, dx:dx + w_out, :].reshape(tile_h * w_out, cin))
    lhs = jnp.concatenate(slabs, axis=-1)                    # (tile_h*W, 9*Cin)

    # One MXU matmul per tile; contracting the minor dim of BOTH operands
    # lands the result channel-first (Cout, tile_h*W) => lane-dense stores.
    acc = lax.dot_general(w_ref[...], lhs,
                          dimension_numbers=(((1,), (1,)), ((), ())),
                          preferred_element_type=jnp.float32)

    feat = acc + b_ref[...]                                  # (Cout, tile_h*W)
    # fused F.normalize(dim=channel): sublane reduce (XLU) + rsqrt (EUP)
    ss = jnp.sum(feat * feat, axis=0, keepdims=True)         # (1, tile_h*W)
    qn = feat * lax.rsqrt(jnp.maximum(ss, NORM_EPS * NORM_EPS))
    feat_ref[...] = feat
    q_ref[...] = qn


def conv2d_bias_norm_pallas(img, weight, bias, *, target_rows=256):
    """3x3 conv (stride 1, pad 1) + bias, fused with channel-wise L2 normalize.

    NCHW input; returns two channel-first maps of shape (N, Cout, H*W):
      feat_cf = conv(img) + bias            (flattened NCHW feature map)
      q_cf    = F.normalize(feat_cf, dim=1) (the module's q_grid layout)
    """
    N, C, H, W = img.shape
    Cout, Cin, KH, KW = weight.shape
    assert Cin == C and KH == 3 and KW == 3

    # Pick tile_h so the matmul N-dim (tile_h*W) is ~target_rows (256 fills the
    # v6e/v7x 2x256^2 MXU; 128 already suffices on v5e) and the output block
    # stays lane-aligned (tile_h*W % 128 == 0, or the tile covers the full map).
    tile_h = max(1, min(H, target_rows // W))
    while tile_h > 1 and H % tile_h != 0:
        tile_h -= 1
    if tile_h != H and (tile_h * W) % 128 != 0:
        tile_h = H

    # One cheap layout pass + halo pad, cast to bf16 in the wrapper so the
    # HBM->VMEM DMA carries half the bytes and the kernel does no per-tap casts.
    # TODO(synk): at real backbone resolutions the padded image should be
    #             halo-tiled over H instead of kept fully resident (v7x 64 MiB).
    x_nhwc = jnp.transpose(img, (0, 2, 3, 1))
    xp = jnp.pad(x_nhwc, ((0, 0), (1, 1), (1, 1), (0, 0))).astype(jnp.bfloat16)
    # OIHW -> (Cout, KH*KW*Cin), K ordered (dy, dx, cin) to match the im2col
    # concat order inside the kernel; bf16 MXU operands, f32 accumulation.
    w_p = jnp.transpose(weight, (0, 2, 3, 1)).reshape(Cout, KH * KW * Cin)
    w_p = w_p.astype(jnp.bfloat16)
    b_p = bias.reshape(Cout, 1).astype(jnp.float32)

    grid = (N, H // tile_h)
    flops = 2 * N * H * W * Cin * KH * KW * Cout
    bytes_accessed = (xp.size * 2 + w_p.size * 2 + b_p.size * 4
                      + 2 * N * H * W * Cout * 4)
    feat_cf, q_cf = pl.pallas_call(
        _conv_bias_norm_kernel,
        out_shape=(jax.ShapeDtypeStruct((N, Cout, H * W), jnp.float32),
                   jax.ShapeDtypeStruct((N, Cout, H * W), jnp.float32)),
        grid=grid,
        in_specs=[
            pl.BlockSpec((None, H + 2, W + 2, Cin), lambda n, h: (n, 0, 0, 0)),
            pl.BlockSpec((Cout, KH * KW * Cin), lambda n, h: (0, 0)),
            pl.BlockSpec((Cout, 1), lambda n, h: (0, 0)),
        ],
        out_specs=(
            pl.BlockSpec((None, Cout, tile_h * W), lambda n, h: (n, 0, h)),
            pl.BlockSpec((None, Cout, tile_h * W), lambda n, h: (n, 0, h)),
        ),
        compiler_params=pltpu.CompilerParams(
            dimension_semantics=("parallel", "parallel")),
        cost_estimate=pl.CostEstimate(flops=int(flops),
                                      transcendentals=int(N * H * W),
                                      bytes_accessed=int(bytes_accessed)),
    )(xp, w_p, b_p)
    return feat_cf, q_cf


# --------------------------------------------------------------------------
# Kernel 2: fused similarity + _spatial_ir, memory bank streamed in bf16 tiles
#   d_all = q @ memory^T ; s_all = exp(d_all / T)
#   pos   = (bag match) & (0 < dist^2 < threshold^2)
#   s_pos = sum(where(pos, s_all, 0), dim=1)  (accumulated across bank tiles)
# --------------------------------------------------------------------------
def _spatial_sim_kernel(q_ref, mem_ref, qside_ref, bside_ref,
                        s_all_ref, pos_ref, s_pos_ref):
    j = pl.program_id(1)

    @pl.when(j == 0)
    def _init():
        s_pos_ref[...] = jnp.zeros_like(s_pos_ref)

    # q (B, D) x memory tile (TILE_N, D): contract the minor dim of both so the
    # bank is never transposed in VMEM; bf16 operands, f32 accumulation.
    d = lax.dot_general(q_ref[...], mem_ref[...],
                        dimension_numbers=(((1,), (1,)), ((), ())),
                        preferred_element_type=jnp.float32)
    s = jnp.exp(d * (1.0 / T_SOFTMAX))                       # EUP

    bag_q = qside_ref[:, 0:1]                                # (B, 1)
    xq = qside_ref[:, 1:2]
    yq = qside_ref[:, 2:3]
    bag_b = bside_ref[0:1, :]                                # (1, TILE_N)
    xb = bside_ref[1:2, :]
    yb = bside_ref[2:3, :]

    chosen = bag_q == bag_b                                  # broadcast (B, TN)
    dxc = xq - xb
    dyc = yq - yb
    dist2 = dxc * dxc + dyc * dyc                            # squared: no sqrt
    pos = chosen & (dist2 < DIS_THRESHOLD * DIS_THRESHOLD) & (dist2 > 0.0)

    s_all_ref[...] = s
    pos_ref[...] = pos.astype(pos_ref.dtype)                 # compact bf16 0/1
    s_pos_ref[...] += jnp.sum(jnp.where(pos, s, 0.0), axis=1, keepdims=True)


def spatial_similarity_pallas(q, memory, bag_idx, x_coord, y_coord,
                              bag_idxs, x_coords, y_coords, *,
                              tile_n=8192, core_split=2):
    """Returns (s_all (B, Nd) f32, s_pos_spatial (B,) f32, pos_idx (B, Nd) bf16)."""
    B, D = q.shape
    Nd = memory.shape[0]

    # Pad queries to >= 8 rows so the MXU LHS and the output stores are at
    # least sublane-dense; pad-query bag = -2 never matches a real bag.
    B_pad = max(8, _round_up(B, 8))
    # Cap tile_n to the actual bank size; pad the bank to a multiple of
    # core_split*tile_n (pad rows carry bag = -1 so they never count as pos).
    tile_n = min(tile_n, _round_up(pl.cdiv(Nd, core_split), 128))
    chunk = core_split * tile_n
    Nd_pad = _round_up(Nd, chunk)
    n_steps = Nd_pad // chunk

    q_p = jnp.zeros((B_pad, D), jnp.bfloat16).at[:B, :].set(q.astype(jnp.bfloat16))
    mem_p = jnp.zeros((Nd_pad, D), jnp.bfloat16).at[:Nd, :].set(
        memory.astype(jnp.bfloat16))

    # Pack per-query scalars into one resident (B_pad, 3) block and the bank
    # side info into one streamed (3, Nd_pad) block: one side DMA per step.
    q_side = jnp.full((B_pad, 3), -2.0, jnp.float32)
    q_side = q_side.at[:B, 0].set(bag_idx.astype(jnp.float32))
    q_side = q_side.at[:B, 1].set(x_coord.astype(jnp.float32))
    q_side = q_side.at[:B, 2].set(y_coord.astype(jnp.float32))

    b_side = jnp.full((3, Nd_pad), -1.0, jnp.float32)
    b_side = b_side.at[0, :Nd].set(bag_idxs.astype(jnp.float32))
    b_side = b_side.at[1, :Nd].set(x_coords.astype(jnp.float32))
    b_side = b_side.at[2, :Nd].set(y_coords.astype(jnp.float32))

    col = lambda p, j: p * n_steps + j
    flops = 2 * B_pad * Nd_pad * D + 8 * B_pad * Nd_pad
    bytes_accessed = (B_pad * D * 2 + Nd_pad * D * 2 + Nd_pad * 12 + B_pad * 12
                      + B_pad * Nd_pad * 4 + B_pad * Nd_pad * 2
                      + core_split * B_pad * 4)

    # NOTE: if the bank DMA is still exposed after enlarging tile_n, add
    # pipeline_mode=pl.Buffered(3) on the memory BlockSpec.
    s_all, pos_idx, s_pos = pl.pallas_call(
        _spatial_sim_kernel,
        out_shape=(
            jax.ShapeDtypeStruct((B_pad, Nd_pad), jnp.float32),
            jax.ShapeDtypeStruct((B_pad, Nd_pad), jnp.bfloat16),
            jax.ShapeDtypeStruct((core_split, B_pad, 1), jnp.float32),
        ),
        grid=(core_split, n_steps),
        in_specs=[
            pl.BlockSpec((B_pad, D), lambda p, j: (0, 0)),            # q (resident)
            pl.BlockSpec((tile_n, D), lambda p, j: (col(p, j), 0)),   # bank tile
            pl.BlockSpec((B_pad, 3), lambda p, j: (0, 0)),            # query side
            pl.BlockSpec((3, tile_n), lambda p, j: (0, col(p, j))),   # bank side
        ],
        out_specs=(
            pl.BlockSpec((B_pad, tile_n), lambda p, j: (0, col(p, j))),
            pl.BlockSpec((B_pad, tile_n), lambda p, j: (0, col(p, j))),
            pl.BlockSpec((None, B_pad, 1), lambda p, j: (p, 0, 0)),   # s_pos acc
        ),
        compiler_params=pltpu.CompilerParams(
            dimension_semantics=("parallel", "arbitrary")),
        cost_estimate=pl.CostEstimate(flops=int(flops),
                                      transcendentals=int(B_pad * Nd_pad),
                                      bytes_accessed=int(bytes_accessed)),
    )(q_p, mem_p, q_side, b_side)

    s_pos = jnp.sum(s_pos[:, :, 0], axis=0)                  # sum core splits
    return s_all[:B, :Nd], s_pos[:B], pos_idx[:B, :Nd]


# --------------------------------------------------------------------------
# Forward wrappers
# --------------------------------------------------------------------------
def forward_test(img, conv_w, conv_b):
    """SpatialCLMcrop.forward_test: backbone -> (N, C, H*W) -> normalize(dim=1).

    The fused kernel already emits the normalized grid in the module's
    (N, C, H*W) layout, so no transpose is needed outside.
    """
    feat_cf, q_cf = conv2d_bias_norm_pallas(img, conv_w, conv_b)
    return q_cf, feat_cf


def forward_train_hotpath(feat_cf, memory, bag_idx, x_coord, y_coord,
                          bag_idxs, x_coords, y_coords):
    """Hot path of forward_train: pooled & normalized q, s_all, _spatial_ir."""
    # AdaptiveAvgPool2d((1,1)) + flatten == mean over the spatial axis of the
    # channel-first map; normalize like nn.functional.normalize (cheap glue).
    x_pool = feat_cf.mean(axis=-1)                           # (N, C)
    q = x_pool / jnp.maximum(
        jnp.sqrt(jnp.sum(x_pool * x_pool, axis=1, keepdims=True)), NORM_EPS)
    return spatial_similarity_pallas(q, memory, bag_idx, x_coord, y_coord,
                                     bag_idxs, x_coords, y_coords), q


# --------------------------------------------------------------------------
# Main
# --------------------------------------------------------------------------
if __name__ == "__main__":
    key = jax.random.PRNGKey(0)
    k_img, k_w, k_b, k_mem, k_bag, k_xc, k_yc = jax.random.split(key, 7)

    N, Cin, H, W = 2, 4, 16, 16
    Cout = 32
    Ndata = 256                      # size of the memory bank / dataset

    img = jax.random.normal(k_img, (N, Cin, H, W), jnp.float32)
    conv_w = 0.1 * jax.random.normal(k_w, (Cout, Cin, 3, 3), jnp.float32)
    conv_b = 0.01 * jax.random.normal(k_b, (Cout,), jnp.float32)

    memory = jax.random.normal(k_mem, (Ndata, Cout), jnp.float32)
    memory = memory / jnp.linalg.norm(memory, axis=1, keepdims=True)
    bag_idxs = jax.random.randint(k_bag, (Ndata,), 0, 8, jnp.int32)
    x_coords = jax.random.randint(k_xc, (Ndata,), 0, 6, jnp.int32).astype(jnp.float32)
    y_coords = jax.random.randint(k_yc, (Ndata,), 0, 6, jnp.int32).astype(jnp.float32)

    # queries correspond to the first N entries of the dataset
    bag_idx = bag_idxs[:N]
    x_coord = x_coords[:N]
    y_coord = y_coords[:N]

    # ---------------- forward_test ----------------
    q_grid, feat_cf = forward_test(img, conv_w, conv_b)
    q_grid = jax.block_until_ready(q_grid)

    # Reference: the kernel feeds the MXU bf16 operands with f32 accumulation,
    # so run the reference conv on bf16-rounded operands at HIGHEST precision.
    img_r = img.astype(jnp.bfloat16).astype(jnp.float32)
    w_r = conv_w.astype(jnp.bfloat16).astype(jnp.float32)
    feat_ref = lax.conv_general_dilated(
        img_r, w_r, window_strides=(1, 1), padding="SAME",
        dimension_numbers=("NCHW", "OIHW", "NCHW"),
        precision=lax.Precision.HIGHEST) + conv_b[None, :, None, None]
    feat_nchw = feat_cf.reshape(N, Cout, H, W)
    np.testing.assert_allclose(np.asarray(feat_nchw), np.asarray(feat_ref),
                               rtol=2e-4, atol=2e-4)

    g_ref = feat_ref.reshape(N, Cout, H * W)
    g_ref = g_ref / jnp.maximum(
        jnp.sqrt(jnp.sum(g_ref * g_ref, axis=1, keepdims=True)), NORM_EPS)
    np.testing.assert_allclose(np.asarray(q_grid), np.asarray(g_ref),
                               rtol=5e-4, atol=5e-4)

    # ---------------- forward_train hot path ----------------
    (s_all, s_pos_spatial, pos_idx), q = forward_train_hotpath(
        feat_cf, memory, bag_idx, x_coord, y_coord, bag_idxs, x_coords, y_coords)
    s_all = jax.block_until_ready(s_all)

    # Reference on the same bf16-rounded operands the kernel streams.
    q_r = q.astype(jnp.bfloat16).astype(jnp.float32)
    mem_r = memory.astype(jnp.bfloat16).astype(jnp.float32)
    d_ref = jnp.einsum("bc,nc->bn", q_r, mem_r, precision=lax.Precision.HIGHEST)
    s_ref = jnp.exp(d_ref / T_SOFTMAX)
    chosen = bag_idxs[None, :] == bag_idx[:, None]
    dist = jnp.sqrt((x_coord[:, None] - x_coords[None, :]) ** 2 +
                    (y_coord[:, None] - y_coords[None, :]) ** 2)
    pos_ref = chosen & (dist < DIS_THRESHOLD) & (dist > 0.0)
    s_pos_ref = jnp.sum(jnp.where(pos_ref, s_ref, 0.0), axis=1)

    np.testing.assert_allclose(np.asarray(s_all), np.asarray(s_ref),
                               rtol=5e-4, atol=1e-3)
    np.testing.assert_allclose(np.asarray(pos_idx.astype(jnp.float32)),
                               np.asarray(pos_ref.astype(jnp.float32)),
                               rtol=0, atol=0)
    np.testing.assert_allclose(np.asarray(s_pos_spatial), np.asarray(s_pos_ref),
                               rtol=5e-4, atol=1e-3)

    print("KERNEL_OK")
</pallas_src>

<mosaic_0001>
module attributes {stable_mosaic.version = 11 : i64} {
  func.func @_conv_bias_norm_kernel(%arg0: i32, %arg1: i32, %arg2: memref<1x18x18x4xbf16, #tpu.memory_space<vmem>>, %arg3: memref<32x36xbf16, #tpu.memory_space<vmem>>, %arg4: memref<32x1xf32, #tpu.memory_space<vmem>>, %arg5: memref<1x32x256xf32, #tpu.memory_space<vmem>>, %arg6: memref<1x32x256xf32, #tpu.memory_space<vmem>>) attributes {dimension_semantics = [#tpu.dimension_semantics<parallel>, #tpu.dimension_semantics<parallel>], iteration_bounds = array<i64: 2, 1>, scalar_prefetch = 0 : i64, scratch_operands = 0 : i64, tpu.core_type = #tpu.core_type<tc>, window_params = [{transform_indices = @transform_0, window_bounds = array<i64: 1, 18, 18, 4>}, {pipeline_mode = #tpu.pipeline_mode<synchronous>, transform_indices = @transform_1, window_bounds = array<i64: 32, 36>}, {pipeline_mode = #tpu.pipeline_mode<synchronous>, transform_indices = @transform_2, window_bounds = array<i64: 32, 1>}, {transform_indices = @transform_3, window_bounds = array<i64: 1, 32, 256>}, {transform_indices = @transform_4, window_bounds = array<i64: 1, 32, 256>}]} {
    %c16_i32 = arith.constant 16 : i32
    %0 = arith.muli %arg1, %c16_i32 : i32
    %c0_i32 = arith.constant 0 : i32
    %1 = arith.addi %0, %c0_i32 : i32
    %c0 = arith.constant 0 : index
    %2 = arith.index_cast %1 : i32 to index
    %c0_0 = arith.constant 0 : index
    %c0_1 = arith.constant 0 : index
    %3 = vector.load %arg2[%c0, %2, %c0_0, %c0_1] : memref<1x18x18x4xbf16, #tpu.memory_space<vmem>>, vector<1x16x18x4xbf16>
    %4 = vector.shape_cast %3 : vector<1x16x18x4xbf16> to vector<16x18x4xbf16>
    %5 = vector.extract_strided_slice %4 {offsets = [0, 0, 0], sizes = [16, 16, 4], strides = [1, 1, 1]} : vector<16x18x4xbf16> to vector<16x16x4xbf16>
    %6 = vector.shape_cast %5 : vector<16x16x4xbf16> to vector<256x4xbf16>
    %7 = vector.extract_strided_slice %4 {offsets = [0, 1, 0], sizes = [16, 16, 4], strides = [1, 1, 1]} : vector<16x18x4xbf16> to vector<16x16x4xbf16>
    %8 = vector.shape_cast %7 : vector<16x16x4xbf16> to vector<256x4xbf16>
    %9 = vector.extract_strided_slice %4 {offsets = [0, 2, 0], sizes = [16, 16, 4], strides = [1, 1, 1]} : vector<16x18x4xbf16> to vector<16x16x4xbf16>
    %10 = vector.shape_cast %9 : vector<16x16x4xbf16> to vector<256x4xbf16>
    %c1_i32 = arith.constant 1 : i32
    %11 = arith.addi %0, %c1_i32 : i32
    %c0_2 = arith.constant 0 : index
    %12 = arith.index_cast %11 : i32 to index
    %c0_3 = arith.constant 0 : index
    %c0_4 = arith.constant 0 : index
    %13 = vector.load %arg2[%c0_2, %12, %c0_3, %c0_4] : memref<1x18x18x4xbf16, #tpu.memory_space<vmem>>, vector<1x16x18x4xbf16>
    %14 = vector.shape_cast %13 : vector<1x16x18x4xbf16> to vector<16x18x4xbf16>
    %15 = vector.extract_strided_slice %14 {offsets = [0, 0, 0], sizes = [16, 16, 4], strides = [1, 1, 1]} : vector<16x18x4xbf16> to vector<16x16x4xbf16>
    %16 = vector.shape_cast %15 : vector<16x16x4xbf16> to vector<256x4xbf16>
    %17 = vector.extract_strided_slice %14 {offsets = [0, 1, 0], sizes = [16, 16, 4], strides = [1, 1, 1]} : vector<16x18x4xbf16> to vector<16x16x4xbf16>
    %18 = vector.shape_cast %17 : vector<16x16x4xbf16> to vector<256x4xbf16>
    %19 = vector.extract_strided_slice %14 {offsets = [0, 2, 0], sizes = [16, 16, 4], strides = [1, 1, 1]} : vector<16x18x4xbf16> to vector<16x16x4xbf16>
    %20 = vector.shape_cast %19 : vector<16x16x4xbf16> to vector<256x4xbf16>
    %c2_i32 = arith.constant 2 : i32
    %21 = arith.addi %0, %c2_i32 : i32
    %c0_5 = arith.constant 0 : index
    %22 = arith.index_cast %21 : i32 to index
    %c0_6 = arith.constant 0 : index
    %c0_7 = arith.constant 0 : index
    %23 = vector.load %arg2[%c0_5, %22, %c0_6, %c0_7] : memref<1x18x18x4xbf16, #tpu.memory_space<vmem>>, vector<1x16x18x4xbf16>
    %24 = vector.shape_cast %23 : vector<1x16x18x4xbf16> to vector<16x18x4xbf16>
    %25 = vector.extract_strided_slice %24 {offsets = [0, 0, 0], sizes = [16, 16, 4], strides = [1, 1, 1]} : vector<16x18x4xbf16> to vector<16x16x4xbf16>
    %26 = vector.shape_cast %25 : vector<16x16x4xbf16> to vector<256x4xbf16>
    %27 = vector.extract_strided_slice %24 {offsets = [0, 1, 0], sizes = [16, 16, 4], strides = [1, 1, 1]} : vector<16x18x4xbf16> to vector<16x16x4xbf16>
    %28 = vector.shape_cast %27 : vector<16x16x4xbf16> to vector<256x4xbf16>
    %29 = vector.extract_strided_slice %24 {offsets = [0, 2, 0], sizes = [16, 16, 4], strides = [1, 1, 1]} : vector<16x18x4xbf16> to vector<16x16x4xbf16>
    %30 = vector.shape_cast %29 : vector<16x16x4xbf16> to vector<256x4xbf16>
    %31 = tpu.concatenate %6, %8, %10, %16, %18, %20, %26, %28, %30 in 1 : vector<256x4xbf16>, vector<256x4xbf16>, vector<256x4xbf16>, vector<256x4xbf16>, vector<256x4xbf16>, vector<256x4xbf16>, vector<256x4xbf16>, vector<256x4xbf16>, vector<256x4xbf16> -> vector<256x36xbf16>
    %c0_8 = arith.constant 0 : index
    %c0_9 = arith.constant 0 : index
    %32 = vector.load %arg3[%c0_8, %c0_9] : memref<32x36xbf16, #tpu.memory_space<vmem>>, vector<32x36xbf16>
    %cst = arith.constant dense<0.000000e+00> : vector<32x256xf32>
    %33 = tpu.matmul %32, %31, %cst {dimension_numbers = #tpu.dot_dimension_numbers<[1], [1], [0], [0], [0, 0, 1, 0], [], []>} : vector<32x36xbf16>, vector<256x36xbf16>, vector<32x256xf32> -> vector<32x256xf32>
    %c0_10 = arith.constant 0 : index
    %c0_11 = arith.constant 0 : index
    %34 = vector.load %arg4[%c0_10, %c0_11] : memref<32x1xf32, #tpu.memory_space<vmem>>, vector<32x1xf32>
    %35 = vector.broadcast %34 : vector<32x1xf32> to vector<32x256xf32>
    %36 = arith.addf %33, %35 : vector<32x256xf32>
    %37 = arith.mulf %36, %36 : vector<32x256xf32>
    %cst_12 = arith.constant dense<0.000000e+00> : vector<256xf32>
    %38 = vector.multi_reduction <add>, %37, %cst_12 [0] : vector<32x256xf32> to vector<256xf32>
    %39 = vector.shape_cast %38 : vector<256xf32> to vector<1x256xf32>
    %cst_13 = arith.constant 1.000000e-24 : f32
    %40 = vector.broadcast %cst_13 : f32 to vector<1x256xf32>
    %41 = arith.maximumf %39, %40 : vector<1x256xf32>
    %42 = math.rsqrt %41 : vector<1x256xf32>
    %43 = vector.broadcast %42 : vector<1x256xf32> to vector<32x256xf32>
    %44 = arith.mulf %36, %43 : vector<32x256xf32>
    %c0_14 = arith.constant 0 : index
    %c0_15 = arith.constant 0 : index
    %c0_16 = arith.constant 0 : index
    %45 = vector.load %arg5[%c0_14, %c0_15, %c0_16] : memref<1x32x256xf32, #tpu.memory_space<vmem>>, vector<1x32x256xf32>
    %46 = vector.shape_cast %45 : vector<1x32x256xf32> to vector<32x256xf32>
    %47 = vector.shape_cast %36 : vector<32x256xf32> to vector<1x32x256xf32>
    tpu.vector_store %arg5[%c0_14, %c0_15, %c0_16], %47 {strides = array<i32>} : memref<1x32x256xf32, #tpu.memory_space<vmem>>, vector<1x32x256xf32>,
    %c0_17 = arith.constant 0 : index
    %c0_18 = arith.constant 0 : index
    %c0_19 = arith.constant 0 : index
    %48 = vector.load %arg6[%c0_17, %c0_18, %c0_19] : memref<1x32x256xf32, #tpu.memory_space<vmem>>, vector<1x32x256xf32>
    %49 = vector.shape_cast %48 : vector<1x32x256xf32> to vector<32x256xf32>
    %50 = vector.shape_cast %44 : vector<32x256xf32> to vector<1x32x256xf32>
    tpu.vector_store %arg6[%c0_17, %c0_18, %c0_19], %50 {strides = array<i32>} : memref<1x32x256xf32, #tpu.memory_space<vmem>>, vector<1x32x256xf32>,
    return
  }
  func.func @transform_0(%arg0: i32, %arg1: i32) -> (i32, i32, i32, i32) {
    %c0_i32 = arith.constant 0 : i32
    %c0_i32_0 = arith.constant 0 : i32
    %c0_i32_1 = arith.constant 0 : i32
    %c0_i32_2 = arith.constant 0 : i32
    return %arg0, %c0_i32, %c0_i32_0, %c0_i32_1 : i32, i32, i32, i32
  }
  func.func @transform_1(%arg0: i32, %arg1: i32) -> (i32, i32) {
    %c0_i32 = arith.constant 0 : i32
    %c0_i32_0 = arith.constant 0 : i32
    %c0_i32_1 = arith.constant 0 : i32
    return %c0_i32, %c0_i32_0 : i32, i32
  }
  func.func @transform_2(%arg0: i32, %arg1: i32) -> (i32, i32) {
    %c0_i32 = arith.constant 0 : i32
    %c0_i32_0 = arith.constant 0 : i32
    %c0_i32_1 = arith.constant 0 : i32
    return %c0_i32, %c0_i32_0 : i32, i32
  }
  func.func @transform_3(%arg0: i32, %arg1: i32) -> (i32, i32, i32) {
    %c0_i32 = arith.constant 0 : i32
    %c0_i32_0 = arith.constant 0 : i32
    return %arg0, %c0_i32, %arg1 : i32, i32, i32
  }
  func.func @transform_4(%arg0: i32, %arg1: i32) -> (i32, i32, i32) {
    %c0_i32 = arith.constant 0 : i32
    %c0_i32_0 = arith.constant 0 : i32
    return %arg0, %c0_i32, %arg1 : i32, i32, i32
  }
}

</mosaic_0001>

<llo_original>
// kernel: tpu_custom_call.1
$region0: #{tpu_custom_call.1}
  #allocation0 [shape = 'u32[]', space=smem, size = 0x4, offset = 0x4, fixed_abs, tag = 'smem constant byte address 0x4 - core index']
  #allocation1 [shape = 'u32[144,128]{1,0:T(1,128)}', space=vmem, size = 0x12000, scoped, tag = 'internal scratch']
  %s0 = inlined_call_operand.vmem [shape: bf16[2,18,18,4], index: 0, kind: input, shape index: {}]
  %s1 = inlined_call_operand.vmem [shape: bf16[32,36], index: 1, kind: input, shape index: {}]
  %s2 = inlined_call_operand.vmem [shape: f32[32,1], index: 2, kind: input, shape index: {}]
  %s3 = inlined_call_operand.hbm [shape: f32[2,32,256], index: 3, kind: output, shape index: {0}]
  %s4 = inlined_call_operand.hbm [shape: f32[2,32,256], index: 4, kind: output, shape index: {1}]
  %5 = xla_tuple %s3, %s4
  %s6 = sld [smem:[#allocation0]]
  $region53: #{tpu_custom_call.1} parent=0
    _
  %s8 = ssub.s32 1, %s6
  %s9 = scalar_select 0, %s8, %s6
  $region1: #{tpu_custom_call.1} parent=0
    #allocation2 [shape = 'u8[65536]{0}', space=vmem, size = 0x10000, scoped, tag = 'output window, operand 0']
    #allocation3 [shape = 's32[2]{0}', space=sflag, size = 0x8, scoped, tag = 'scoped memory for tpu_custom_call.1']
    #allocation4 [shape = 'u8[65536]{0}', space=vmem, size = 0x10000, scoped, tag = 'output window, operand 1']
    #allocation5 [shape = 's32[2]{0}', space=sflag, size = 0x8, scoped, tag = 'scoped memory for tpu_custom_call.1']
    %10 = vsyncpa [#allocation3], 0
    %s11 = scalar_lea.sflag [#allocation3], 1
    %12 = vsyncpa %s11, 0
    %13 = vsyncpa [#allocation5], 0
    %s14 = scalar_lea.sflag [#allocation5], 1
    %15 = vsyncpa %s14, 0
    loop: start=0, step=1, limit=4
    $region2: #{tpu_custom_call.1} parent=1 // loop_pre_header
      _
    $region3: #{tpu_custom_call.1} parent=1 // loop_header
      %s17 = sphi 0, %s21
      %p18 = scmp.ge.s32.totalorder %s17, 4
      %s24 = sphi 0, %s36
      %s25 = sphi 0, %s32
      %s26 = sphi 0, %s24
      %s27 = sphi 0, %s25
      %s28 = sphi 0, %s26
      %s29 = sphi 0, %s27
      %s39 = sphi 0, %s41
      %s42 = sphi 0, %s39
      %s43 = sphi 0, %s42
      %s59 = sphi 0, %s43
      %s63 = sphi 0, %s63
      %s65 = sphi 0, %s63
      %s66 = sphi 0, %s65
      %s80 = sphi 0, %s66
      %s84 = sphi 0, %s84
      %s86 = sphi 0, %s84
      %s87 = sphi 0, %s86
      %s101 = sphi 0, %s87
      %s109 = sphi 0, %s111
      %s112 = sphi 0, %s109
      %s113 = sphi 0, %s112
      %s129 = sphi 0, %s113
      %s137 = sphi 0, %s139
      %s140 = sphi 0, %s137
      %s141 = sphi 0, %s140
      %s157 = sphi 0, %s141
    $region4: #{tpu_custom_call.1} parent=1 // loop_header_branch
      %20 = sbr.rel (%p18) target = $region8
    $region5: #{tpu_custom_call.1} parent=1 // loop_body
      %s22 = ssub.s32 %s17, 1
      %s23 = ssub.s32 %s17, 2
      %s30 = sadd.s32 1, %s25
      %p31 = scmp.ge.s32.totalorder %s30, 1
      %s32 = scalar_select %p31, 0, %s30
      %s33 = sadd.s32 1, %s24
      %s34 = scalar_select %p31, %s33, %s24
      %p35 = scmp.ge.s32.totalorder %s34, 2
      %s36 = scalar_select %p35, 0, %s34
      %s37 = ssub.s32 %s24, %s36
      %p38 = scmp.eq.s32.totalorder %s37, 0
      %s40 = sadd.s32 %s39, 1
      %s41 = scalar_select %p38, %s39, %s40
      %p44 = pneg %p38
      %p45 = scmp.eq.s32.totalorder %s17, 1
      %p46 = por %p44, %p45
      %p47 = scmp.ne.s32.totalorder %s39, %s42
      %p48 = scmp.eq.s32.totalorder %s17, 0
      %p49 = por %p47, %p48
      %p50 = scmp.ne.s32.totalorder %s39, %s42
      %p51 = scmp.eq.s32.totalorder %s22, 1
      %p52 = por %p50, %p51
      %p53 = scmp.ne.s32.totalorder %s42, %s43
      %p54 = scmp.eq.s32.totalorder %s22, 0
      %p55 = por %p53, %p54
      %p56 = scmp.ne.s32.totalorder %s42, %s43
      %p57 = scmp.eq.s32.totalorder %s23, 1
      %p58 = por %p56, %p57
      %p60 = scmp.ne.s32.totalorder %s43, %s59
      %p61 = scmp.eq.s32.totalorder %s23, 0
      %p62 = por %p60, %p61
      %s64 = sadd.s32 %s63, 1
      %p67 = scmp.eq.s32.totalorder %s17, 1
      %p68 = scmp.ne.s32.totalorder %s63, %s65
      %p69 = scmp.eq.s32.totalorder %s17, 0
      %p70 = por %p68, %p69
      %p71 = scmp.ne.s32.totalorder %s63, %s65
      %p72 = scmp.eq.s32.totalorder %s22, 1
      %p73 = por %p71, %p72
      %p74 = scmp.ne.s32.totalorder %s65, %s66
      %p75 = scmp.eq.s32.totalorder %s22, 0
      %p76 = por %p74, %p75
      %p77 = scmp.ne.s32.totalorder %s65, %s66
      %p78 = scmp.eq.s32.totalorder %s23, 1
      %p79 = por %p77, %p78
      %p81 = scmp.ne.s32.totalorder %s66, %s80
      %p82 = scmp.eq.s32.totalorder %s23, 0
      %p83 = por %p81, %p82
      %s85 = sadd.s32 %s84, 1
      %p88 = scmp.eq.s32.totalorder %s17, 1
      %p89 = scmp.ne.s32.totalorder %s84, %s86
      %p90 = scmp.eq.s32.totalorder %s17, 0
      %p91 = por %p89, %p90
      %p92 = scmp.ne.s32.totalorder %s84, %s86
      %p93 = scmp.eq.s32.totalorder %s22, 1
      %p94 = por %p92, %p93
      %p95 = scmp.ne.s32.totalorder %s86, %s87
      %p96 = scmp.eq.s32.totalorder %s22, 0
      %p97 = por %p95, %p96
      %p98 = scmp.ne.s32.totalorder %s86, %s87
      %p99 = scmp.eq.s32.totalorder %s23, 1
      %p100 = por %p98, %p99
      %p102 = scmp.ne.s32.totalorder %s87, %s101
      %p103 = scmp.eq.s32.totalorder %s23, 0
      %p104 = por %p102, %p103
      %s105 = ssub.s32 %s24, %s36
      %s106 = ssub.s32 %s25, %s32
      %s107 = sor.u32 %s105, %s106
      %p108 = scmp.eq.s32.totalorder %s107, 0
      %s110 = sadd.s32 %s109, 1
      %s111 = scalar_select %p108, %s109, %s110
      %p114 = pneg %p108
      %p115 = scmp.eq.s32.totalorder %s17, 1
      %p116 = por %p114, %p115
      %p117 = scmp.ne.s32.totalorder %s109, %s112
      %p118 = scmp.eq.s32.totalorder %s17, 0
      %p119 = por %p117, %p118
      %p120 = scmp.ne.s32.totalorder %s109, %s112
      %p121 = scmp.eq.s32.totalorder %s22, 1
      %p122 = por %p120, %p121
      %p123 = scmp.ne.s32.totalorder %s112, %s113
      %p124 = scmp.eq.s32.totalorder %s22, 0
      %p125 = por %p123, %p124
      %p126 = scmp.ne.s32.totalorder %s112, %s113
      %p127 = scmp.eq.s32.totalorder %s23, 1
      %p128 = por %p126, %p127
      %p130 = scmp.ne.s32.totalorder %s113, %s129
      %p131 = scmp.eq.s32.totalorder %s23, 0
      %p132 = por %p130, %p131
      %s133 = ssub.s32 %s24, %s36
      %s134 = ssub.s32 %s25, %s32
      %s135 = sor.u32 %s133, %s134
      %p136 = scmp.eq.s32.totalorder %s135, 0
      %s138 = sadd.s32 %s137, 1
      %s139 = scalar_select %p136, %s137, %s138
      %p142 = pneg %p136
      %p143 = scmp.eq.s32.totalorder %s17, 1
      %p144 = por %p142, %p143
      %p145 = scmp.ne.s32.totalorder %s137, %s140
      %p146 = scmp.eq.s32.totalorder %s17, 0
      %p147 = por %p145, %p146
      %p148 = scmp.ne.s32.totalorder %s137, %s140
      %p149 = scmp.eq.s32.totalorder %s22, 1
      %p150 = por %p148, %p149
      %p151 = scmp.ne.s32.totalorder %s140, %s141
      %p152 = scmp.eq.s32.totalorder %s22, 0
      %p153 = por %p151, %p152
      %p154 = scmp.ne.s32.totalorder %s140, %s141
      %p155 = scmp.eq.s32.totalorder %s23, 1
      %p156 = por %p154, %p155
      %p158 = scmp.ne.s32.totalorder %s141, %s157
      %p159 = scmp.eq.s32.totalorder %s23, 0
      %p160 = por %p158, %p159
      %p161 = scmp.le.s32.totalorder 1, %s17
      %p162 = scmp.lt.s32.totalorder %s17, 3
      %p163 = pnand %p161, %p162
      %p164 = pneg %p163
      // Predicated region
      $region9: #{tpu_custom_call.1} parent=5 // pred_check
        _
      $region10: #{tpu_custom_call.1} parent=5 // pred_check_branch
        %166 = sbr.rel (%p163) target = $region12
      $region11: #{tpu_custom_call.1} parent=5 // pred_region
        %s167 = ssub.s32 %s17, 1
        // Predicated region
        $region13: #{tpu_custom_call.1} parent=11 // pred_check
          %p168 = pneg %p76
        $region14: #{tpu_custom_call.1} parent=11 // pred_check_branch
          %170 = sbr.rel (%p168) target = $region16
        $region15: #{tpu_custom_call.1} parent=11 // pred_region
          _
        $region16: #{tpu_custom_call.1} parent=11 // pred_fallthru
          _
        // Predicated region
        $region17: #{tpu_custom_call.1} parent=11 // pred_check
          %p171 = pneg %p97
        $region18: #{tpu_custom_call.1} parent=11 // pred_check_branch
          %173 = sbr.rel (%p171) target = $region20
        $region19: #{tpu_custom_call.1} parent=11 // pred_region
          _
        $region20: #{tpu_custom_call.1} parent=11 // pred_fallthru
          _
      $region12: #{tpu_custom_call.1} parent=5 // pred_fallthru
        _
      %p174 = scmp.lt.s32.totalorder %s17, 2
      // Predicated region
      $region21: #{tpu_custom_call.1} parent=5 // pred_check
        %p175 = pneg %p174
      $region22: #{tpu_custom_call.1} parent=5 // pred_check_branch
        %177 = sbr.rel (%p175) target = $region24
      $region23: #{tpu_custom_call.1} parent=5 // pred_region
        // Predicated region
        $region25: #{tpu_custom_call.1} parent=23 // pred_check
          %p178 = pneg %p49
        $region26: #{tpu_custom_call.1} parent=23 // pred_check_branch
          %180 = sbr.rel (%p178) target = $region28
        $region27: #{tpu_custom_call.1} parent=23 // pred_region
          %p181 = scmp.lt.s32.totalorder %s24, 1
          %s182 = scalar_select %p181, %s24, 1
          %s183 = smul.addr %s182, 54
          %s184 = smul.addr %s183, 4
          %s185 = scalar_lea.vmem %s0, %s184
        $region28: #{tpu_custom_call.1} parent=23 // pred_fallthru
          _
      $region24: #{tpu_custom_call.1} parent=5 // pred_fallthru
        _
      %p186 = scmp.le.s32.totalorder 1, %s17
      %p187 = scmp.lt.s32.totalorder %s17, 3
      %p188 = pnand %p186, %p187
      %p189 = pneg %p188
      // Predicated region
      $region29: #{tpu_custom_call.1} parent=5 // pred_check
        _
      $region30: #{tpu_custom_call.1} parent=5 // pred_check_branch
        %191 = sbr.rel (%p188) target = $region32
      $region31: #{tpu_custom_call.1} parent=5 // pred_region
        %s192 = ssub.s32 %s17, 1
        %p193 = scmp.lt.s32.totalorder %s26, 1
        %s194 = scalar_select %p193, %s26, 1
        %s195 = smul.addr %s194, 54
        %s196 = smul.addr %s195, 4
        %s197 = scalar_lea.vmem %s0, %s196
        %p198 = pneg %p55
        %p199 = pneg %p52
        %p200 = pneg %p76
        %p201 = pneg %p73
        %p202 = pneg %p97
        %p203 = pneg %p94
        %p204 = pneg %p125
        %p205 = pneg %p122
        %s206 = sand.u32 %s112, 1
        %s207 = scalar_lea.sflag [#allocation3], %s206
        %s208 = sand.u32 %s112, 1
        %s209 = smul.addr %s208, 64
        %s210 = scalar_lea.vmem [#allocation2], %s209
        %p211 = pneg %p153
        %p212 = pneg %p150
        %s213 = sand.u32 %s140, 1
        %s214 = scalar_lea.sflag [#allocation5], %s213
        %s215 = sand.u32 %s140, 1
        %s216 = smul.addr %s215, 64
        %s217 = scalar_lea.vmem [#allocation4], %s216
        %p218 = scmp.lt.s32.totalorder %s26, 1
        %s219 = scalar_select %p218, %s26, 1
        %s220 = smul.addr %s219, 54
        %s221 = smul.addr %s220, 4
        %s222 = scalar_lea.vmem %s0, %s221
        %s223 = smul.u32 2, %s27
        %s224 = smul.u32 2, %s27
        %s226 = smul.u32 %s27, 16
        %s227 = smul.u32 %s226, 3
        %s228 = smul.addr %s227, 4
        %s229 = scalar_lea.vmem %s222, %s228
        %v230 = vld [vmem:[%s229] sm:$0xf]
        %v231 = vld [vmem:[%s229 + $0x4] sm:$0xf]
        %v232 = vld [vmem:[%s229 + $0x8] sm:$0x1]
        %v233 = vld [vmem:[%s229 + $0xc] sm:$0xf]
        %v234 = vld [vmem:[%s229 + $0x10] sm:$0xf]
        %v235 = vld [vmem:[%s229 + $0x14] sm:$0x1]
        %v236 = vld [vmem:[%s229 + $0x18] sm:$0xf]
        %v237 = vld [vmem:[%s229 + $0x1c] sm:$0xf]
        %v238 = vld [vmem:[%s229 + $0x20] sm:$0x1]
        %v239 = vld [vmem:[%s229 + $0x24] sm:$0xf]
        %v240 = vld [vmem:[%s229 + $0x28] sm:$0xf]
        %v241 = vld [vmem:[%s229 + $0x2c] sm:$0x1]
        %v242 = vld [vmem:[%s229 + $0x30] sm:$0xf]
        %v243 = vld [vmem:[%s229 + $0x34] sm:$0xf]
        %v244 = vld [vmem:[%s229 + $0x38] sm:$0x1]
        %v245 = vld [vmem:[%s229 + $0x3c] sm:$0xf]
        %v246 = vld [vmem:[%s229 + $0x40] sm:$0xf]
        %v247 = vld [vmem:[%s229 + $0x44] sm:$0x1]
        %v248 = vld [vmem:[%s229 + $0x48] sm:$0xf]
        %v249 = vld [vmem:[%s229 + $0x4c] sm:$0xf]
        %v250 = vld [vmem:[%s229 + $0x50] sm:$0x1]
        %v251 = vld [vmem:[%s229 + $0x54] sm:$0xf]
        %v252 = vld [vmem:[%s229 + $0x58] sm:$0xf]
        %v253 = vld [vmem:[%s229 + $0x5c] sm:$0x1]
        %v254 = vld [vmem:[%s229 + $0x60] sm:$0xf]
        %v255 = vld [vmem:[%s229 + $0x64] sm:$0xf]
        %v256 = vld [vmem:[%s229 + $0x68] sm:$0x1]
        %v257 = vld [vmem:[%s229 + $0x6c] sm:$0xf]
        %v258 = vld [vmem:[%s229 + $0x70] sm:$0xf]
        %v259 = vld [vmem:[%s229 + $0x74] sm:$0x1]
        %v260 = vld [vmem:[%s229 + $0x78] sm:$0xf]
        %v261 = vld [vmem:[%s229 + $0x7c] sm:$0xf]
        %v262 = vld [vmem:[%s229 + $0x80] sm:$0x1]
        %v263 = vld [vmem:[%s229 + $0x84] sm:$0xf]
        %v264 = vld [vmem:[%s229 + $0x88] sm:$0xf]
        %v265 = vld [vmem:[%s229 + $0x8c] sm:$0x1]
        %v266 = vld [vmem:[%s229 + $0x90] sm:$0xf]
        %v267 = vld [vmem:[%s229 + $0x94] sm:$0xf]
        %v268 = vld [vmem:[%s229 + $0x98] sm:$0x1]
        %v269 = vld [vmem:[%s229 + $0x9c] sm:$0xf]
        %v270 = vld [vmem:[%s229 + $0xa0] sm:$0xf]
        %v271 = vld [vmem:[%s229 + $0xa4] sm:$0x1]
        %v272 = vld [vmem:[%s229 + $0xa8] sm:$0xf]
        %v273 = vld [vmem:[%s229 + $0xac] sm:$0xf]
        %v274 = vld [vmem:[%s229 + $0xb0] sm:$0x1]
        %v275 = vld [vmem:[%s229 + $0xb4] sm:$0xf]
        %v276 = vld [vmem:[%s229 + $0xb8] sm:$0xf]
        %v277 = vld [vmem:[%s229 + $0xbc] sm:$0x1]
        %vm278 = vsmask.f32 3328
        %vm279 = vsmask.f32 7440
        %vm280 = vmor %vm278, %vm279
        %v282 = vshrl.u32 %v230, 16
        %v284 = vrot.slane %v282, 4
        %v285 = vshll.u32 %v230, 16
        %v287 = vrot.slane %v285, 5
        %v288 = vor.u32 %v284, %v287
        %v289 = vrot.slane %v288, 4
        %v291 = vshll.u32 %v231, 16
        %v293 = vrot.slane %v291, 5
        %v294 = vsel %vm280, %v289, %v293
        %v295 = vshrl.u32 %v231, 16
        %v297 = vrot.slane %v295, 4
        %v298 = vor.u32 %v297, %v293
        %v299 = vrot.slane %v298, 4
        %v301 = vshll.u32 %v232, 16
        %v303 = vrot.slane %v301, 5
        %v304 = vsel %vm280, %v299, %v303
        %v306 = vshrl.u32 %v233, 16
        %v308 = vrot.slane %v306, 4
        %v309 = vshll.u32 %v233, 16
        %v311 = vrot.slane %v309, 5
        %v312 = vor.u32 %v308, %v311
        %v313 = vrot.slane %v312, 4
        %v315 = vshll.u32 %v234, 16
        %v317 = vrot.slane %v315, 5
        %v318 = vsel %vm280, %v313, %v317
        %v319 = vshrl.u32 %v234, 16
        %v321 = vrot.slane %v319, 4
        %v322 = vor.u32 %v321, %v317
        %v323 = vrot.slane %v322, 4
        %v325 = vshll.u32 %v235, 16
        %v327 = vrot.slane %v325, 5
        %v328 = vsel %vm280, %v323, %v327
        %v330 = vshrl.u32 %v236, 16
        %v332 = vrot.slane %v330, 4
        %v333 = vshll.u32 %v236, 16
        %v335 = vrot.slane %v333, 5
        %v336 = vor.u32 %v332, %v335
        %v337 = vrot.slane %v336, 4
        %v339 = vshll.u32 %v237, 16
        %v341 = vrot.slane %v339, 5
        %v342 = vsel %vm280, %v337, %v341
        %v343 = vshrl.u32 %v237, 16
        %v345 = vrot.slane %v343, 4
        %v346 = vor.u32 %v345, %v341
        %v347 = vrot.slane %v346, 4
        %v349 = vshll.u32 %v238, 16
        %v351 = vrot.slane %v349, 5
        %v352 = vsel %vm280, %v347, %v351
        %v354 = vshrl.u32 %v239, 16
        %v356 = vrot.slane %v354, 4
        %v357 = vshll.u32 %v239, 16
        %v359 = vrot.slane %v357, 5
        %v360 = vor.u32 %v356, %v359
        %v361 = vrot.slane %v360, 4
        %v363 = vshll.u32 %v240, 16
        %v365 = vrot.slane %v363, 5
        %v366 = vsel %vm280, %v361, %v365
        %v367 = vshrl.u32 %v240, 16
        %v369 = vrot.slane %v367, 4
        %v370 = vor.u32 %v369, %v365
        %v371 = vrot.slane %v370, 4
        %v373 = vshll.u32 %v241, 16
        %v375 = vrot.slane %v373, 5
        %v376 = vsel %vm280, %v371, %v375
        %v378 = vshrl.u32 %v242, 16
        %v380 = vrot.slane %v378, 4
        %v381 = vshll.u32 %v242, 16
        %v383 = vrot.slane %v381, 5
        %v384 = vor.u32 %v380, %v383
        %v385 = vrot.slane %v384, 4
        %v387 = vshll.u32 %v243, 16
        %v389 = vrot.slane %v387, 5
        %v390 = vsel %vm280, %v385, %v389
        %v391 = vshrl.u32 %v243, 16
        %v393 = vrot.slane %v391, 4
        %v394 = vor.u32 %v393, %v389
        %v395 = vrot.slane %v394, 4
        %v397 = vshll.u32 %v244, 16
        %v399 = vrot.slane %v397, 5
        %v400 = vsel %vm280, %v395, %v399
        %v402 = vshrl.u32 %v245, 16
        %v404 = vrot.slane %v402, 4
        %v405 = vshll.u32 %v245, 16
        %v407 = vrot.slane %v405, 5
        %v408 = vor.u32 %v404, %v407
        %v409 = vrot.slane %v408, 4
        %v411 = vshll.u32 %v246, 16
        %v413 = vrot.slane %v411, 5
        %v414 = vsel %vm280, %v409, %v413
        %v415 = vshrl.u32 %v246, 16
        %v417 = vrot.slane %v415, 4
        %v418 = vor.u32 %v417, %v413
        %v419 = vrot.slane %v418, 4
        %v421 = vshll.u32 %v247, 16
        %v423 = vrot.slane %v421, 5
        %v424 = vsel %vm280, %v419, %v423
        %v426 = vshrl.u32 %v248, 16
        %v428 = vrot.slane %v426, 4
        %v429 = vshll.u32 %v248, 16
        %v431 = vrot.slane %v429, 5
        %v432 = vor.u32 %v428, %v431
        %v433 = vrot.slane %v432, 4
        %v435 = vshll.u32 %v249, 16
        %v437 = vrot.slane %v435, 5
        %v438 = vsel %vm280, %v433, %v437
        %v439 = vshrl.u32 %v249, 16
        %v441 = vrot.slane %v439, 4
        %v442 = vor.u32 %v441, %v437
        %v443 = vrot.slane %v442, 4
        %v445 = vshll.u32 %v250, 16
        %v447 = vrot.slane %v445, 5
        %v448 = vsel %vm280, %v443, %v447
        %v450 = vshrl.u32 %v251, 16
        %v452 = vrot.slane %v450, 4
        %v453 = vshll.u32 %v251, 16
        %v455 = vrot.slane %v453, 5
        %v456 = vor.u32 %v452, %v455
        %v457 = vrot.slane %v456, 4
        %v459 = vshll.u32 %v252, 16
        %v461 = vrot.slane %v459, 5
        %v462 = vsel %vm280, %v457, %v461
        %v463 = vshrl.u32 %v252, 16
        %v465 = vrot.slane %v463, 4
        %v466 = vor.u32 %v465, %v461
        %v467 = vrot.slane %v466, 4
        %v469 = vshll.u32 %v253, 16
        %v471 = vrot.slane %v469, 5
        %v472 = vsel %vm280, %v467, %v471
        %v474 = vshrl.u32 %v254, 16
        %v476 = vrot.slane %v474, 4
        %v477 = vshll.u32 %v254, 16
        %v479 = vrot.slane %v477, 5
        %v480 = vor.u32 %v476, %v479
        %v481 = vrot.slane %v480, 4
        %v483 = vshll.u32 %v255, 16
        %v485 = vrot.slane %v483, 5
        %v486 = vsel %vm280, %v481, %v485
        %v487 = vshrl.u32 %v255, 16
        %v489 = vrot.slane %v487, 4
        %v490 = vor.u32 %v489, %v485
        %v491 = vrot.slane %v490, 4
        %v493 = vshll.u32 %v256, 16
        %v495 = vrot.slane %v493, 5
        %v496 = vsel %vm280, %v491, %v495
        %v498 = vshrl.u32 %v257, 16
        %v500 = vrot.slane %v498, 4
        %v501 = vshll.u32 %v257, 16
        %v503 = vrot.slane %v501, 5
        %v504 = vor.u32 %v500, %v503
        %v505 = vrot.slane %v504, 4
        %v507 = vshll.u32 %v258, 16
        %v509 = vrot.slane %v507, 5
        %v510 = vsel %vm280, %v505, %v509
        %v511 = vshrl.u32 %v258, 16
        %v513 = vrot.slane %v511, 4
        %v514 = vor.u32 %v513, %v509
        %v515 = vrot.slane %v514, 4
        %v517 = vshll.u32 %v259, 16
        %v519 = vrot.slane %v517, 5
        %v520 = vsel %vm280, %v515, %v519
        %v522 = vshrl.u32 %v260, 16
        %v524 = vrot.slane %v522, 4
        %v525 = vshll.u32 %v260, 16
        %v527 = vrot.slane %v525, 5
        %v528 = vor.u32 %v524, %v527
        %v529 = vrot.slane %v528, 4
        %v531 = vshll.u32 %v261, 16
        %v533 = vrot.slane %v531, 5
        %v534 = vsel %vm280, %v529, %v533
        %v535 = vshrl.u32 %v261, 16
        %v537 = vrot.slane %v535, 4
        %v538 = vor.u32 %v537, %v533
        %v539 = vrot.slane %v538, 4
        %v541 = vshll.u32 %v262, 16
        %v543 = vrot.slane %v541, 5
        %v544 = vsel %vm280, %v539, %v543
        %v546 = vshrl.u32 %v263, 16
        %v548 = vrot.slane %v546, 4
        %v549 = vshll.u32 %v263, 16
        %v551 = vrot.slane %v549, 5
        %v552 = vor.u32 %v548, %v551
        %v553 = vrot.slane %v552, 4
        %v555 = vshll.u32 %v264, 16
        %v557 = vrot.slane %v555, 5
        %v558 = vsel %vm280, %v553, %v557
        %v559 = vshrl.u32 %v264, 16
        %v561 = vrot.slane %v559, 4
        %v562 = vor.u32 %v561, %v557
        %v563 = vrot.slane %v562, 4
        %v565 = vshll.u32 %v265, 16
        %v567 = vrot.slane %v565, 5
        %v568 = vsel %vm280, %v563, %v567
        %v570 = vshrl.u32 %v266, 16
        %v572 = vrot.slane %v570, 4
        %v573 = vshll.u32 %v266, 16
        %v575 = vrot.slane %v573, 5
        %v576 = vor.u32 %v572, %v575
        %v577 = vrot.slane %v576, 4
        %v579 = vshll.u32 %v267, 16
        %v581 = vrot.slane %v579, 5
        %v582 = vsel %vm280, %v577, %v581
        %v583 = vshrl.u32 %v267, 16
        %v585 = vrot.slane %v583, 4
        %v586 = vor.u32 %v585, %v581
        %v587 = vrot.slane %v586, 4
        %v589 = vshll.u32 %v268, 16
        %v591 = vrot.slane %v589, 5
        %v592 = vsel %vm280, %v587, %v591
        %v594 = vshrl.u32 %v269, 16
        %v596 = vrot.slane %v594, 4
        %v597 = vshll.u32 %v269, 16
        %v599 = vrot.slane %v597, 5
        %v600 = vor.u32 %v596, %v599
        %v601 = vrot.slane %v600, 4
        %v603 = vshll.u32 %v270, 16
        %v605 = vrot.slane %v603, 5
        %v606 = vsel %vm280, %v601, %v605
        %v607 = vshrl.u32 %v270, 16
        %v609 = vrot.slane %v607, 4
        %v610 = vor.u32 %v609, %v605
        %v611 = vrot.slane %v610, 4
        %v613 = vshll.u32 %v271, 16
        %v615 = vrot.slane %v613, 5
        %v616 = vsel %vm280, %v611, %v615
        %v618 = vshrl.u32 %v272, 16
        %v620 = vrot.slane %v618, 4
        %v621 = vshll.u32 %v272, 16
        %v623 = vrot.slane %v621, 5
        %v624 = vor.u32 %v620, %v623
        %v625 = vrot.slane %v624, 4
        %v627 = vshll.u32 %v273, 16
        %v629 = vrot.slane %v627, 5
        %v630 = vsel %vm280, %v625, %v629
        %v631 = vshrl.u32 %v273, 16
        %v633 = vrot.slane %v631, 4
        %v634 = vor.u32 %v633, %v629
        %v635 = vrot.slane %v634, 4
        %v637 = vshll.u32 %v274, 16
        %v639 = vrot.slane %v637, 5
        %v640 = vsel %vm280, %v635, %v639
        %v642 = vshrl.u32 %v275, 16
        %v644 = vrot.slane %v642, 4
        %v645 = vshll.u32 %v275, 16
        %v647 = vrot.slane %v645, 5
        %v648 = vor.u32 %v644, %v647
        %v649 = vrot.slane %v648, 4
        %v651 = vshll.u32 %v276, 16
        %v653 = vrot.slane %v651, 5
        %v654 = vsel %vm280, %v649, %v653
        %v655 = vshrl.u32 %v276, 16
        %v657 = vrot.slane %v655, 4
        %v658 = vor.u32 %v657, %v653
        %v659 = vrot.slane %v658, 4
        %v661 = vshll.u32 %v277, 16
        %v663 = vrot.slane %v661, 5
        %v664 = vsel %vm280, %v659, %v663
        %vm713 = vcmask 1042432
        %vm714 = vcmask 1046532
        %vm715 = vmor %vm713, %vm714
        %v716 = vrot.slane %v230, 5
        %v717 = vrot.slane %v716, 4
        %v718 = vrot.slane %v231, 5
        %v719 = vsel %vm715, %v717, %v718
        %v720 = vrot.slane %v718, 4
        %v721 = vrot.slane %v232, 5
        %v722 = vsel %vm715, %v720, %v721
        %v723 = vrot.slane %v233, 5
        %v724 = vrot.slane %v723, 4
        %v725 = vrot.slane %v234, 5
        %v726 = vsel %vm715, %v724, %v725
        %v727 = vrot.slane %v725, 4
        %v728 = vrot.slane %v235, 5
        %v729 = vsel %vm715, %v727, %v728
        %v730 = vrot.slane %v236, 5
        %v731 = vrot.slane %v730, 4
        %v732 = vrot.slane %v237, 5
        %v733 = vsel %vm715, %v731, %v732
        %v734 = vrot.slane %v732, 4
        %v735 = vrot.slane %v238, 5
        %v736 = vsel %vm715, %v734, %v735
        %v737 = vrot.slane %v239, 5
        %v738 = vrot.slane %v737, 4
        %v739 = vrot.slane %v240, 5
        %v740 = vsel %vm715, %v738, %v739
        %v741 = vrot.slane %v739, 4
        %v742 = vrot.slane %v241, 5
        %v743 = vsel %vm715, %v741, %v742
        %v744 = vrot.slane %v242, 5
        %v745 = vrot.slane %v744, 4
        %v746 = vrot.slane %v243, 5
        %v747 = vsel %vm715, %v745, %v746
        %v748 = vrot.slane %v746, 4
        %v749 = vrot.slane %v244, 5
        %v750 = vsel %vm715, %v748, %v749
        %v751 = vrot.slane %v245, 5
        %v752 = vrot.slane %v751, 4
        %v753 = vrot.slane %v246, 5
        %v754 = vsel %vm715, %v752, %v753
        %v755 = vrot.slane %v753, 4
        %v756 = vrot.slane %v247, 5
        %v757 = vsel %vm715, %v755, %v756
        %v758 = vrot.slane %v248, 5
        %v759 = vrot.slane %v758, 4
        %v760 = vrot.slane %v249, 5
        %v761 = vsel %vm715, %v759, %v760
        %v762 = vrot.slane %v760, 4
        %v763 = vrot.slane %v250, 5
        %v764 = vsel %vm715, %v762, %v763
        %v765 = vrot.slane %v251, 5
        %v766 = vrot.slane %v765, 4
        %v767 = vrot.slane %v252, 5
        %v768 = vsel %vm715, %v766, %v767
        %v769 = vrot.slane %v767, 4
        %v770 = vrot.slane %v253, 5
        %v771 = vsel %vm715, %v769, %v770
        %v772 = vrot.slane %v254, 5
        %v773 = vrot.slane %v772, 4
        %v774 = vrot.slane %v255, 5
        %v775 = vsel %vm715, %v773, %v774
        %v776 = vrot.slane %v774, 4
        %v777 = vrot.slane %v256, 5
        %v778 = vsel %vm715, %v776, %v777
        %v779 = vrot.slane %v257, 5
        %v780 = vrot.slane %v779, 4
        %v781 = vrot.slane %v258, 5
        %v782 = vsel %vm715, %v780, %v781
        %v783 = vrot.slane %v781, 4
        %v784 = vrot.slane %v259, 5
        %v785 = vsel %vm715, %v783, %v784
        %v786 = vrot.slane %v260, 5
        %v787 = vrot.slane %v786, 4
        %v788 = vrot.slane %v261, 5
        %v789 = vsel %vm715, %v787, %v788
        %v790 = vrot.slane %v788, 4
        %v791 = vrot.slane %v262, 5
        %v792 = vsel %vm715, %v790, %v791
        %v793 = vrot.slane %v263, 5
        %v794 = vrot.slane %v793, 4
        %v795 = vrot.slane %v264, 5
        %v796 = vsel %vm715, %v794, %v795
        %v797 = vrot.slane %v795, 4
        %v798 = vrot.slane %v265, 5
        %v799 = vsel %vm715, %v797, %v798
        %v800 = vrot.slane %v266, 5
        %v801 = vrot.slane %v800, 4
        %v802 = vrot.slane %v267, 5
        %v803 = vsel %vm715, %v801, %v802
        %v804 = vrot.slane %v802, 4
        %v805 = vrot.slane %v268, 5
        %v806 = vsel %vm715, %v804, %v805
        %v807 = vrot.slane %v269, 5
        %v808 = vrot.slane %v807, 4
        %v809 = vrot.slane %v270, 5
        %v810 = vsel %vm715, %v808, %v809
        %v811 = vrot.slane %v809, 4
        %v812 = vrot.slane %v271, 5
        %v813 = vsel %vm715, %v811, %v812
        %v814 = vrot.slane %v272, 5
        %v815 = vrot.slane %v814, 4
        %v816 = vrot.slane %v273, 5
        %v817 = vsel %vm715, %v815, %v816
        %v818 = vrot.slane %v816, 4
        %v819 = vrot.slane %v274, 5
        %v820 = vsel %vm715, %v818, %v819
        %v821 = vrot.slane %v275, 5
        %v822 = vrot.slane %v821, 4
        %v823 = vrot.slane %v276, 5
        %v824 = vsel %vm715, %v822, %v823
        %v825 = vrot.slane %v823, 4
        %v826 = vrot.slane %v277, 5
        %v827 = vsel %vm715, %v825, %v826
        %s828 = sadd.s32 %s226, 1
        %s829 = smul.u32 %s828, 3
        %s830 = smul.addr %s829, 4
        %s831 = scalar_lea.vmem %s222, %s830
        %v832 = vld [vmem:[%s831] sm:$0xf]
        %v833 = vld [vmem:[%s831 + $0x4] sm:$0xf]
        %v834 = vld [vmem:[%s831 + $0x8] sm:$0x1]
        %v835 = vld [vmem:[%s831 + $0xc] sm:$0xf]
        %v836 = vld [vmem:[%s831 + $0x10] sm:$0xf]
        %v837 = vld [vmem:[%s831 + $0x14] sm:$0x1]
        %v838 = vld [vmem:[%s831 + $0x18] sm:$0xf]
        %v839 = vld [vmem:[%s831 + $0x1c] sm:$0xf]
        %v840 = vld [vmem:[%s831 + $0x20] sm:$0x1]
        %v841 = vld [vmem:[%s831 + $0x24] sm:$0xf]
        %v842 = vld [vmem:[%s831 + $0x28] sm:$0xf]
        %v843 = vld [vmem:[%s831 + $0x2c] sm:$0x1]
        %v844 = vld [vmem:[%s831 + $0x30] sm:$0xf]
        %v845 = vld [vmem:[%s831 + $0x34] sm:$0xf]
        %v846 = vld [vmem:[%s831 + $0x38] sm:$0x1]
        %v847 = vld [vmem:[%s831 + $0x3c] sm:$0xf]
        %v848 = vld [vmem:[%s831 + $0x40] sm:$0xf]
        %v849 = vld [vmem:[%s831 + $0x44] sm:$0x1]
        %v850 = vld [vmem:[%s831 + $0x48] sm:$0xf]
        %v851 = vld [vmem:[%s831 + $0x4c] sm:$0xf]
        %v852 = vld [vmem:[%s831 + $0x50] sm:$0x1]
        %v853 = vld [vmem:[%s831 + $0x54] sm:$0xf]
        %v854 = vld [vmem:[%s831 + $0x58] sm:$0xf]
        %v855 = vld [vmem:[%s831 + $0x5c] sm:$0x1]
        %v856 = vld [vmem:[%s831 + $0x60] sm:$0xf]
        %v857 = vld [vmem:[%s831 + $0x64] sm:$0xf]
        %v858 = vld [vmem:[%s831 + $0x68] sm:$0x1]
        %v859 = vld [vmem:[%s831 + $0x6c] sm:$0xf]
        %v860 = vld [vmem:[%s831 + $0x70] sm:$0xf]
        %v861 = vld [vmem:[%s831 + $0x74] sm:$0x1]
        %v862 = vld [vmem:[%s831 + $0x78] sm:$0xf]
        %v863 = vld [vmem:[%s831 + $0x7c] sm:$0xf]
        %v864 = vld [vmem:[%s831 + $0x80] sm:$0x1]
        %v865 = vld [vmem:[%s831 + $0x84] sm:$0xf]
        %v866 = vld [vmem:[%s831 + $0x88] sm:$0xf]
        %v867 = vld [vmem:[%s831 + $0x8c] sm:$0x1]
        %v868 = vld [vmem:[%s831 + $0x90] sm:$0xf]
        %v869 = vld [vmem:[%s831 + $0x94] sm:$0xf]
        %v870 = vld [vmem:[%s831 + $0x98] sm:$0x1]
        %v871 = vld [vmem:[%s831 + $0x9c] sm:$0xf]
        %v872 = vld [vmem:[%s831 + $0xa0] sm:$0xf]
        %v873 = vld [vmem:[%s831 + $0xa4] sm:$0x1]
        %v874 = vld [vmem:[%s831 + $0xa8] sm:$0xf]
        %v875 = vld [vmem:[%s831 + $0xac] sm:$0xf]
        %v876 = vld [vmem:[%s831 + $0xb0] sm:$0x1]
        %v877 = vld [vmem:[%s831 + $0xb4] sm:$0xf]
        %v878 = vld [vmem:[%s831 + $0xb8] sm:$0xf]
        %v879 = vld [vmem:[%s831 + $0xbc] sm:$0x1]
        %v881 = vshrl.u32 %v832, 16
        %v883 = vrot.slane %v881, 4
        %v884 = vshll.u32 %v832, 16
        %v886 = vrot.slane %v884, 5
        %v887 = vor.u32 %v883, %v886
        %v888 = vrot.slane %v887, 4
        %v890 = vshll.u32 %v833, 16
        %v892 = vrot.slane %v890, 5
        %v893 = vsel %vm280, %v888, %v892
        %v894 = vshrl.u32 %v833, 16
        %v896 = vrot.slane %v894, 4
        %v897 = vor.u32 %v896, %v892
        %v898 = vrot.slane %v897, 4
        %v900 = vshll.u32 %v834, 16
        %v902 = vrot.slane %v900, 5
        %v903 = vsel %vm280, %v898, %v902
        %v905 = vshrl.u32 %v835, 16
        %v907 = vrot.slane %v905, 4
        %v908 = vshll.u32 %v835, 16
        %v910 = vrot.slane %v908, 5
        %v911 = vor.u32 %v907, %v910
        %v912 = vrot.slane %v911, 4
        %v914 = vshll.u32 %v836, 16
        %v916 = vrot.slane %v914, 5
        %v917 = vsel %vm280, %v912, %v916
        %v918 = vshrl.u32 %v836, 16
        %v920 = vrot.slane %v918, 4
        %v921 = vor.u32 %v920, %v916
        %v922 = vrot.slane %v921, 4
        %v924 = vshll.u32 %v837, 16
        %v926 = vrot.slane %v924, 5
        %v927 = vsel %vm280, %v922, %v926
        %v929 = vshrl.u32 %v838, 16
        %v931 = vrot.slane %v929, 4
        %v932 = vshll.u32 %v838, 16
        %v934 = vrot.slane %v932, 5
        %v935 = vor.u32 %v931, %v934
        %v936 = vrot.slane %v935, 4
        %v938 = vshll.u32 %v839, 16
        %v940 = vrot.slane %v938, 5
        %v941 = vsel %vm280, %v936, %v940
        %v942 = vshrl.u32 %v839, 16
        %v944 = vrot.slane %v942, 4
        %v945 = vor.u32 %v944, %v940
        %v946 = vrot.slane %v945, 4
        %v948 = vshll.u32 %v840, 16
        %v950 = vrot.slane %v948, 5
        %v951 = vsel %vm280, %v946, %v950
        %v953 = vshrl.u32 %v841, 16
        %v955 = vrot.slane %v953, 4
        %v956 = vshll.u32 %v841, 16
        %v958 = vrot.slane %v956, 5
        %v959 = vor.u32 %v955, %v958
        %v960 = vrot.slane %v959, 4
        %v962 = vshll.u32 %v842, 16
        %v964 = vrot.slane %v962, 5
        %v965 = vsel %vm280, %v960, %v964
        %v966 = vshrl.u32 %v842, 16
        %v968 = vrot.slane %v966, 4
        %v969 = vor.u32 %v968, %v964
        %v970 = vrot.slane %v969, 4
        %v972 = vshll.u32 %v843, 16
        %v974 = vrot.slane %v972, 5
        %v975 = vsel %vm280, %v970, %v974
        %v977 = vshrl.u32 %v844, 16
        %v979 = vrot.slane %v977, 4
        %v980 = vshll.u32 %v844, 16
        %v982 = vrot.slane %v980, 5
        %v983 = vor.u32 %v979, %v982
        %v984 = vrot.slane %v983, 4
        %v986 = vshll.u32 %v845, 16
        %v988 = vrot.slane %v986, 5
        %v989 = vsel %vm280, %v984, %v988
        %v990 = vshrl.u32 %v845, 16
        %v992 = vrot.slane %v990, 4
        %v993 = vor.u32 %v992, %v988
        %v994 = vrot.slane %v993, 4
        %v996 = vshll.u32 %v846, 16
        %v998 = vrot.slane %v996, 5
        %v999 = vsel %vm280, %v994, %v998
        %v1001 = vshrl.u32 %v847, 16
        %v1003 = vrot.slane %v1001, 4
        %v1004 = vshll.u32 %v847, 16
        %v1006 = vrot.slane %v1004, 5
        %v1007 = vor.u32 %v1003, %v1006
        %v1008 = vrot.slane %v1007, 4
        %v1010 = vshll.u32 %v848, 16
        %v1012 = vrot.slane %v1010, 5
        %v1013 = vsel %vm280, %v1008, %v1012
        %v1014 = vshrl.u32 %v848, 16
        %v1016 = vrot.slane %v1014, 4
        %v1017 = vor.u32 %v1016, %v1012
        %v1018 = vrot.slane %v1017, 4
        %v1020 = vshll.u32 %v849, 16
        %v1022 = vrot.slane %v1020, 5
        %v1023 = vsel %vm280, %v1018, %v1022
        %v1025 = vshrl.u32 %v850, 16
        %v1027 = vrot.slane %v1025, 4
        %v1028 = vshll.u32 %v850, 16
        %v1030 = vrot.slane %v1028, 5
        %v1031 = vor.u32 %v1027, %v1030
        %v1032 = vrot.slane %v1031, 4
        %v1034 = vshll.u32 %v851, 16
        %v1036 = vrot.slane %v1034, 5
        %v1037 = vsel %vm280, %v1032, %v1036
        %v1038 = vshrl.u32 %v851, 16
        %v1040 = vrot.slane %v1038, 4
        %v1041 = vor.u32 %v1040, %v1036
        %v1042 = vrot.slane %v1041, 4
        %v1044 = vshll.u32 %v852, 16
        %v1046 = vrot.slane %v1044, 5
        %v1047 = vsel %vm280, %v1042, %v1046
        %v1049 = vshrl.u32 %v853, 16
        %v1051 = vrot.slane %v1049, 4
        %v1052 = vshll.u32 %v853, 16
        %v1054 = vrot.slane %v1052, 5
        %v1055 = vor.u32 %v1051, %v1054
        %v1056 = vrot.slane %v1055, 4
        %v1058 = vshll.u32 %v854, 16
        %v1060 = vrot.slane %v1058, 5
        %v1061 = vsel %vm280, %v1056, %v1060
        %v1062 = vshrl.u32 %v854, 16
        %v1064 = vrot.slane %v1062, 4
        %v1065 = vor.u32 %v1064, %v1060
        %v1066 = vrot.slane %v1065, 4
        %v1068 = vshll.u32 %v855, 16
        %v1070 = vrot.slane %v1068, 5
        %v1071 = vsel %vm280, %v1066, %v1070
        %v1073 = vshrl.u32 %v856, 16
        %v1075 = vrot.slane %v1073, 4
        %v1076 = vshll.u32 %v856, 16
        %v1078 = vrot.slane %v1076, 5
        %v1079 = vor.u32 %v1075, %v1078
        %v1080 = vrot.slane %v1079, 4
        %v1082 = vshll.u32 %v857, 16
        %v1084 = vrot.slane %v1082, 5
        %v1085 = vsel %vm280, %v1080, %v1084
        %v1086 = vshrl.u32 %v857, 16
        %v1088 = vrot.slane %v1086, 4
        %v1089 = vor.u32 %v1088, %v1084
        %v1090 = vrot.slane %v1089, 4
        %v1092 = vshll.u32 %v858, 16
        %v1094 = vrot.slane %v1092, 5
        %v1095 = vsel %vm280, %v1090, %v1094
        %v1097 = vshrl.u32 %v859, 16
        %v1099 = vrot.slane %v1097, 4
        %v1100 = vshll.u32 %v859, 16
        %v1102 = vrot.slane %v1100, 5
        %v1103 = vor.u32 %v1099, %v1102
        %v1104 = vrot.slane %v1103, 4
        %v1106 = vshll.u32 %v860, 16
        %v1108 = vrot.slane %v1106, 5
        %v1109 = vsel %vm280, %v1104, %v1108
        %v1110 = vshrl.u32 %v860, 16
        %v1112 = vrot.slane %v1110, 4
        %v1113 = vor.u32 %v1112, %v1108
        %v1114 = vrot.slane %v1113, 4
        %v1116 = vshll.u32 %v861, 16
        %v1118 = vrot.slane %v1116, 5
        %v1119 = vsel %vm280, %v1114, %v1118
        %v1121 = vshrl.u32 %v862, 16
        %v1123 = vrot.slane %v1121, 4
        %v1124 = vshll.u32 %v862, 16
        %v1126 = vrot.slane %v1124, 5
        %v1127 = vor.u32 %v1123, %v1126
        %v1128 = vrot.slane %v1127, 4
        %v1130 = vshll.u32 %v863, 16
        %v1132 = vrot.slane %v1130, 5
        %v1133 = vsel %vm280, %v1128, %v1132
        %v1134 = vshrl.u32 %v863, 16
        %v1136 = vrot.slane %v1134, 4
        %v1137 = vor.u32 %v1136, %v1132
        %v1138 = vrot.slane %v1137, 4
        %v1140 = vshll.u32 %v864, 16
        %v1142 = vrot.slane %v1140, 5
        %v1143 = vsel %vm280, %v1138, %v1142
        %v1145 = vshrl.u32 %v865, 16
        %v1147 = vrot.slane %v1145, 4
        %v1148 = vshll.u32 %v865, 16
        %v1150 = vrot.slane %v1148, 5
        %v1151 = vor.u32 %v1147, %v1150
        %v1152 = vrot.slane %v1151, 4
        %v1154 = vshll.u32 %v866, 16
        %v1156 = vrot.slane %v1154, 5
        %v1157 = vsel %vm280, %v1152, %v1156
        %v1158 = vshrl.u32 %v866, 16
        %v1160 = vrot.slane %v1158, 4
        %v1161 = vor.u32 %v1160, %v1156
        %v1162 = vrot.slane %v1161, 4
        %v1164 = vshll.u32 %v867, 16
        %v1166 = vrot.slane %v1164, 5
        %v1167 = vsel %vm280, %v1162, %v1166
        %v1169 = vshrl.u32 %v868, 16
        %v1171 = vrot.slane %v1169, 4
        %v1172 = vshll.u32 %v868, 16
        %v1174 = vrot.slane %v1172, 5
        %v1175 = vor.u32 %v1171, %v1174
        %v1176 = vrot.slane %v1175, 4
        %v1178 = vshll.u32 %v869, 16
        %v1180 = vrot.slane %v1178, 5
        %v1181 = vsel %vm280, %v1176, %v1180
        %v1182 = vshrl.u32 %v869, 16
        %v1184 = vrot.slane %v1182, 4
        %v1185 = vor.u32 %v1184, %v1180
        %v1186 = vrot.slane %v1185, 4
        %v1188 = vshll.u32 %v870, 16
        %v1190 = vrot.slane %v1188, 5
        %v1191 = vsel %vm280, %v1186, %v1190
        %v1193 = vshrl.u32 %v871, 16
        %v1195 = vrot.slane %v1193, 4
        %v1196 = vshll.u32 %v871, 16
        %v1198 = vrot.slane %v1196, 5
        %v1199 = vor.u32 %v1195, %v1198
        %v1200 = vrot.slane %v1199, 4
        %v1202 = vshll.u32 %v872, 16
        %v1204 = vrot.slane %v1202, 5
        %v1205 = vsel %vm280, %v1200, %v1204
        %v1206 = vshrl.u32 %v872, 16
        %v1208 = vrot.slane %v1206, 4
        %v1209 = vor.u32 %v1208, %v1204
        %v1210 = vrot.slane %v1209, 4
        %v1212 = vshll.u32 %v873, 16
        %v1214 = vrot.slane %v1212, 5
        %v1215 = vsel %vm280, %v1210, %v1214
        %v1217 = vshrl.u32 %v874, 16
        %v1219 = vrot.slane %v1217, 4
        %v1220 = vshll.u32 %v874, 16
        %v1222 = vrot.slane %v1220, 5
        %v1223 = vor.u32 %v1219, %v1222
        %v1224 = vrot.slane %v1223, 4
        %v1226 = vshll.u32 %v875, 16
        %v1228 = vrot.slane %v1226, 5
        %v1229 = vsel %vm280, %v1224, %v1228
        %v1230 = vshrl.u32 %v875, 16
        %v1232 = vrot.slane %v1230, 4
        %v1233 = vor.u32 %v1232, %v1228
        %v1234 = vrot.slane %v1233, 4
        %v1236 = vshll.u32 %v876, 16
        %v1238 = vrot.slane %v1236, 5
        %v1239 = vsel %vm280, %v1234, %v1238
        %v1241 = vshrl.u32 %v877, 16
        %v1243 = vrot.slane %v1241, 4
        %v1244 = vshll.u32 %v877, 16
        %v1246 = vrot.slane %v1244, 5
        %v1247 = vor.u32 %v1243, %v1246
        %v1248 = vrot.slane %v1247, 4
        %v1250 = vshll.u32 %v878, 16
        %v1252 = vrot.slane %v1250, 5
        %v1253 = vsel %vm280, %v1248, %v1252
        %v1254 = vshrl.u32 %v878, 16
        %v1256 = vrot.slane %v1254, 4
        %v1257 = vor.u32 %v1256, %v1252
        %v1258 = vrot.slane %v1257, 4
        %v1260 = vshll.u32 %v879, 16
        %v1262 = vrot.slane %v1260, 5
        %v1263 = vsel %vm280, %v1258, %v1262
        %v1312 = vrot.slane %v832, 5
        %v1313 = vrot.slane %v1312, 4
        %v1314 = vrot.slane %v833, 5
        %v1315 = vsel %vm715, %v1313, %v1314
        %v1316 = vrot.slane %v1314, 4
        %v1317 = vrot.slane %v834, 5
        %v1318 = vsel %vm715, %v1316, %v1317
        %v1319 = vrot.slane %v835, 5
        %v1320 = vrot.slane %v1319, 4
        %v1321 = vrot.slane %v836, 5
        %v1322 = vsel %vm715, %v1320, %v1321
        %v1323 = vrot.slane %v1321, 4
        %v1324 = vrot.slane %v837, 5
        %v1325 = vsel %vm715, %v1323, %v1324
        %v1326 = vrot.slane %v838, 5
        %v1327 = vrot.slane %v1326, 4
        %v1328 = vrot.slane %v839, 5
        %v1329 = vsel %vm715, %v1327, %v1328
        %v1330 = vrot.slane %v1328, 4
        %v1331 = vrot.slane %v840, 5
        %v1332 = vsel %vm715, %v1330, %v1331
        %v1333 = vrot.slane %v841, 5
        %v1334 = vrot.slane %v1333, 4
        %v1335 = vrot.slane %v842, 5
        %v1336 = vsel %vm715, %v1334, %v1335
        %v1337 = vrot.slane %v1335, 4
        %v1338 = vrot.slane %v843, 5
        %v1339 = vsel %vm715, %v1337, %v1338
        %v1340 = vrot.slane %v844, 5
        %v1341 = vrot.slane %v1340, 4
        %v1342 = vrot.slane %v845, 5
        %v1343 = vsel %vm715, %v1341, %v1342
        %v1344 = vrot.slane %v1342, 4
        %v1345 = vrot.slane %v846, 5
        %v1346 = vsel %vm715, %v1344, %v1345
        %v1347 = vrot.slane %v847, 5
        %v1348 = vrot.slane %v1347, 4
        %v1349 = vrot.slane %v848, 5
        %v1350 = vsel %vm715, %v1348, %v1349
        %v1351 = vrot.slane %v1349, 4
        %v1352 = vrot.slane %v849, 5
        %v1353 = vsel %vm715, %v1351, %v1352
        %v1354 = vrot.slane %v850, 5
        %v1355 = vrot.slane %v1354, 4
        %v1356 = vrot.slane %v851, 5
        %v1357 = vsel %vm715, %v1355, %v1356
        %v1358 = vrot.slane %v1356, 4
        %v1359 = vrot.slane %v852, 5
        %v1360 = vsel %vm715, %v1358, %v1359
        %v1361 = vrot.slane %v853, 5
        %v1362 = vrot.slane %v1361, 4
        %v1363 = vrot.slane %v854, 5
        %v1364 = vsel %vm715, %v1362, %v1363
        %v1365 = vrot.slane %v1363, 4
        %v1366 = vrot.slane %v855, 5
        %v1367 = vsel %vm715, %v1365, %v1366
        %v1368 = vrot.slane %v856, 5
        %v1369 = vrot.slane %v1368, 4
        %v1370 = vrot.slane %v857, 5
        %v1371 = vsel %vm715, %v1369, %v1370
        %v1372 = vrot.slane %v1370, 4
        %v1373 = vrot.slane %v858, 5
        %v1374 = vsel %vm715, %v1372, %v1373
        %v1375 = vrot.slane %v859, 5
        %v1376 = vrot.slane %v1375, 4
        %v1377 = vrot.slane %v860, 5
        %v1378 = vsel %vm715, %v1376, %v1377
        %v1379 = vrot.slane %v1377, 4
        %v1380 = vrot.slane %v861, 5
        %v1381 = vsel %vm715, %v1379, %v1380
        %v1382 = vrot.slane %v862, 5
        %v1383 = vrot.slane %v1382, 4
        %v1384 = vrot.slane %v863, 5
        %v1385 = vsel %vm715, %v1383, %v1384
        %v1386 = vrot.slane %v1384, 4
        %v1387 = vrot.slane %v864, 5
        %v1388 = vsel %vm715, %v1386, %v1387
        %v1389 = vrot.slane %v865, 5
        %v1390 = vrot.slane %v1389, 4
        %v1391 = vrot.slane %v866, 5
        %v1392 = vsel %vm715, %v1390, %v1391
        %v1393 = vrot.slane %v1391, 4
        %v1394 = vrot.slane %v867, 5
        %v1395 = vsel %vm715, %v1393, %v1394
        %v1396 = vrot.slane %v868, 5
        %v1397 = vrot.slane %v1396, 4
        %v1398 = vrot.slane %v869, 5
        %v1399 = vsel %vm715, %v1397, %v1398
        %v1400 = vrot.slane %v1398, 4
        %v1401 = vrot.slane %v870, 5
        %v1402 = vsel %vm715, %v1400, %v1401
        %v1403 = vrot.slane %v871, 5
        %v1404 = vrot.slane %v1403, 4
        %v1405 = vrot.slane %v872, 5
        %v1406 = vsel %vm715, %v1404, %v1405
        %v1407 = vrot.slane %v1405, 4
        %v1408 = vrot.slane %v873, 5
        %v1409 = vsel %vm715, %v1407, %v1408
        %v1410 = vrot.slane %v874, 5
        %v1411 = vrot.slane %v1410, 4
        %v1412 = vrot.slane %v875, 5
        %v1413 = vsel %vm715, %v1411, %v1412
        %v1414 = vrot.slane %v1412, 4
        %v1415 = vrot.slane %v876, 5
        %v1416 = vsel %vm715, %v1414, %v1415
        %v1417 = vrot.slane %v877, 5
        %v1418 = vrot.slane %v1417, 4
        %v1419 = vrot.slane %v878, 5
        %v1420 = vsel %vm715, %v1418, %v1419
        %v1421 = vrot.slane %v1419, 4
        %v1422 = vrot.slane %v879, 5
        %v1423 = vsel %vm715, %v1421, %v1422
        %s1424 = sadd.s32 %s226, 2
        %s1425 = smul.u32 %s1424, 3
        %s1426 = smul.addr %s1425, 4
        %s1427 = scalar_lea.vmem %s222, %s1426
        %v1428 = vld [vmem:[%s1427] sm:$0xf]
        %v1429 = vld [vmem:[%s1427 + $0x4] sm:$0xf]
        %v1430 = vld [vmem:[%s1427 + $0x8] sm:$0x1]
        %v1431 = vld [vmem:[%s1427 + $0xc] sm:$0xf]
        %v1432 = vld [vmem:[%s1427 + $0x10] sm:$0xf]
        %v1433 = vld [vmem:[%s1427 + $0x14] sm:$0x1]
        %v1434 = vld [vmem:[%s1427 + $0x18] sm:$0xf]
        %v1435 = vld [vmem:[%s1427 + $0x1c] sm:$0xf]
        %v1436 = vld [vmem:[%s1427 + $0x20] sm:$0x1]
        %v1437 = vld [vmem:[%s1427 + $0x24] sm:$0xf]
        %v1438 = vld [vmem:[%s1427 + $0x28] sm:$0xf]
        %v1439 = vld [vmem:[%s1427 + $0x2c] sm:$0x1]
        %v1440 = vld [vmem:[%s1427 + $0x30] sm:$0xf]
        %v1441 = vld [vmem:[%s1427 + $0x34] sm:$0xf]
        %v1442 = vld [vmem:[%s1427 + $0x38] sm:$0x1]
        %v1443 = vld [vmem:[%s1427 + $0x3c] sm:$0xf]
        %v1444 = vld [vmem:[%s1427 + $0x40] sm:$0xf]
        %v1445 = vld [vmem:[%s1427 + $0x44] sm:$0x1]
        %v1446 = vld [vmem:[%s1427 + $0x48] sm:$0xf]
        %v1447 = vld [vmem:[%s1427 + $0x4c] sm:$0xf]
        %v1448 = vld [vmem:[%s1427 + $0x50] sm:$0x1]
        %v1449 = vld [vmem:[%s1427 + $0x54] sm:$0xf]
        %v1450 = vld [vmem:[%s1427 + $0x58] sm:$0xf]
        %v1451 = vld [vmem:[%s1427 + $0x5c] sm:$0x1]
        %v1452 = vld [vmem:[%s1427 + $0x60] sm:$0xf]
        %v1453 = vld [vmem:[%s1427 + $0x64] sm:$0xf]
        %v1454 = vld [vmem:[%s1427 + $0x68] sm:$0x1]
        %v1455 = vld [vmem:[%s1427 + $0x6c] sm:$0xf]
        %v1456 = vld [vmem:[%s1427 + $0x70] sm:$0xf]
        %v1457 = vld [vmem:[%s1427 + $0x74] sm:$0x1]
        %v1458 = vld [vmem:[%s1427 + $0x78] sm:$0xf]
        %v1459 = vld [vmem:[%s1427 + $0x7c] sm:$0xf]
        %v1460 = vld [vmem:[%s1427 + $0x80] sm:$0x1]
        %v1461 = vld [vmem:[%s1427 + $0x84] sm:$0xf]
        %v1462 = vld [vmem:[%s1427 + $0x88] sm:$0xf]
        %v1463 = vld [vmem:[%s1427 + $0x8c] sm:$0x1]
        %v1464 = vld [vmem:[%s1427 + $0x90] sm:$0xf]
        %v1465 = vld [vmem:[%s1427 + $0x94] sm:$0xf]
        %v1466 = vld [vmem:[%s1427 + $0x98] sm:$0x1]
        %v1467 = vld [vmem:[%s1427 + $0x9c] sm:$0xf]
        %v1468 = vld [vmem:[%s1427 + $0xa0] sm:$0xf]
        %v1469 = vld [vmem:[%s1427 + $0xa4] sm:$0x1]
        %v1470 = vld [vmem:[%s1427 + $0xa8] sm:$0xf]
        %v1471 = vld [vmem:[%s1427 + $0xac] sm:$0xf]
        %v1472 = vld [vmem:[%s1427 + $0xb0] sm:$0x1]
        %v1473 = vld [vmem:[%s1427 + $0xb4] sm:$0xf]
        %v1474 = vld [vmem:[%s1427 + $0xb8] sm:$0xf]
        %v1475 = vld [vmem:[%s1427 + $0xbc] sm:$0x1]
        %v1477 = vshrl.u32 %v1428, 16
        %v1479 = vrot.slane %v1477, 4
        %v1480 = vshll.u32 %v1428, 16
        %v1482 = vrot.slane %v1480, 5
        %v1483 = vor.u32 %v1479, %v1482
        %v1484 = vrot.slane %v1483, 4
        %v1486 = vshll.u32 %v1429, 16
        %v1488 = vrot.slane %v1486, 5
        %v1489 = vsel %vm280, %v1484, %v1488
        %v1490 = vshrl.u32 %v1429, 16
        %v1492 = vrot.slane %v1490, 4
        %v1493 = vor.u32 %v1492, %v1488
        %v1494 = vrot.slane %v1493, 4
        %v1496 = vshll.u32 %v1430, 16
        %v1498 = vrot.slane %v1496, 5
        %v1499 = vsel %vm280, %v1494, %v1498
        %v1501 = vshrl.u32 %v1431, 16
        %v1503 = vrot.slane %v1501, 4
        %v1504 = vshll.u32 %v1431, 16
        %v1506 = vrot.slane %v1504, 5
        %v1507 = vor.u32 %v1503, %v1506
        %v1508 = vrot.slane %v1507, 4
        %v1510 = vshll.u32 %v1432, 16
        %v1512 = vrot.slane %v1510, 5
        %v1513 = vsel %vm280, %v1508, %v1512
        %v1514 = vshrl.u32 %v1432, 16
        %v1516 = vrot.slane %v1514, 4
        %v1517 = vor.u32 %v1516, %v1512
        %v1518 = vrot.slane %v1517, 4
        %v1520 = vshll.u32 %v1433, 16
        %v1522 = vrot.slane %v1520, 5
        %v1523 = vsel %vm280, %v1518, %v1522
        %v1525 = vshrl.u32 %v1434, 16
        %v1527 = vrot.slane %v1525, 4
        %v1528 = vshll.u32 %v1434, 16
        %v1530 = vrot.slane %v1528, 5
        %v1531 = vor.u32 %v1527, %v1530
        %v1532 = vrot.slane %v1531, 4
        %v1534 = vshll.u32 %v1435, 16
        %v1536 = vrot.slane %v1534, 5
        %v1537 = vsel %vm280, %v1532, %v1536
        %v1538 = vshrl.u32 %v1435, 16
        %v1540 = vrot.slane %v1538, 4
        %v1541 = vor.u32 %v1540, %v1536
        %v1542 = vrot.slane %v1541, 4
        %v1544 = vshll.u32 %v1436, 16
        %v1546 = vrot.slane %v1544, 5
        %v1547 = vsel %vm280, %v1542, %v1546
        %v1549 = vshrl.u32 %v1437, 16
        %v1551 = vrot.slane %v1549, 4
        %v1552 = vshll.u32 %v1437, 16
        %v1554 = vrot.slane %v1552, 5
        %v1555 = vor.u32 %v1551, %v1554
        %v1556 = vrot.slane %v1555, 4
        %v1558 = vshll.u32 %v1438, 16
        %v1560 = vrot.slane %v1558, 5
        %v1561 = vsel %vm280, %v1556, %v1560
        %v1562 = vshrl.u32 %v1438, 16
        %v1564 = vrot.slane %v1562, 4
        %v1565 = vor.u32 %v1564, %v1560
        %v1566 = vrot.slane %v1565, 4
        %v1568 = vshll.u32 %v1439, 16
        %v1570 = vrot.slane %v1568, 5
        %v1571 = vsel %vm280, %v1566, %v1570
        %v1573 = vshrl.u32 %v1440, 16
        %v1575 = vrot.slane %v1573, 4
        %v1576 = vshll.u32 %v1440, 16
        %v1578 = vrot.slane %v1576, 5
        %v1579 = vor.u32 %v1575, %v1578
        %v1580 = vrot.slane %v1579, 4
        %v1582 = vshll.u32 %v1441, 16
        %v1584 = vrot.slane %v1582, 5
        %v1585 = vsel %vm280, %v1580, %v1584
        %v1586 = vshrl.u32 %v1441, 16
        %v1588 = vrot.slane %v1586, 4
        %v1589 = vor.u32 %v1588, %v1584
        %v1590 = vrot.slane %v1589, 4
        %v1592 = vshll.u32 %v1442, 16
        %v1594 = vrot.slane %v1592, 5
        %v1595 = vsel %vm280, %v1590, %v1594
        %v1597 = vshrl.u32 %v1443, 16
        %v1599 = vrot.slane %v1597, 4
        %v1600 = vshll.u32 %v1443, 16
        %v1602 = vrot.slane %v1600, 5
        %v1603 = vor.u32 %v1599, %v1602
        %v1604 = vrot.slane %v1603, 4
        %v1606 = vshll.u32 %v1444, 16
        %v1608 = vrot.slane %v1606, 5
        %v1609 = vsel %vm280, %v1604, %v1608
        %v1610 = vshrl.u32 %v1444, 16
        %v1612 = vrot.slane %v1610, 4
        %v1613 = vor.u32 %v1612, %v1608
        %v1614 = vrot.slane %v1613, 4
        %v1616 = vshll.u32 %v1445, 16
        %v1618 = vrot.slane %v1616, 5
        %v1619 = vsel %vm280, %v1614, %v1618
        %v1621 = vshrl.u32 %v1446, 16
        %v1623 = vrot.slane %v1621, 4
        %v1624 = vshll.u32 %v1446, 16
        %v1626 = vrot.slane %v1624, 5
        %v1627 = vor.u32 %v1623, %v1626
        %v1628 = vrot.slane %v1627, 4
        %v1630 = vshll.u32 %v1447, 16
        %v1632 = vrot.slane %v1630, 5
        %v1633 = vsel %vm280, %v1628, %v1632
        %v1634 = vshrl.u32 %v1447, 16
        %v1636 = vrot.slane %v1634, 4
        %v1637 = vor.u32 %v1636, %v1632
        %v1638 = vrot.slane %v1637, 4
        %v1640 = vshll.u32 %v1448, 16
        %v1642 = vrot.slane %v1640, 5
        %v1643 = vsel %vm280, %v1638, %v1642
        %v1645 = vshrl.u32 %v1449, 16
        %v1647 = vrot.slane %v1645, 4
        %v1648 = vshll.u32 %v1449, 16
        %v1650 = vrot.slane %v1648, 5
        %v1651 = vor.u32 %v1647, %v1650
        %v1652 = vrot.slane %v1651, 4
        %v1654 = vshll.u32 %v1450, 16
        %v1656 = vrot.slane %v1654, 5
        %v1657 = vsel %vm280, %v1652, %v1656
        %v1658 = vshrl.u32 %v1450, 16
        %v1660 = vrot.slane %v1658, 4
        %v1661 = vor.u32 %v1660, %v1656
        %v1662 = vrot.slane %v1661, 4
        %v1664 = vshll.u32 %v1451, 16
        %v1666 = vrot.slane %v1664, 5
        %v1667 = vsel %vm280, %v1662, %v1666
        %v1669 = vshrl.u32 %v1452, 16
        %v1671 = vrot.slane %v1669, 4
        %v1672 = vshll.u32 %v1452, 16
        %v1674 = vrot.slane %v1672, 5
        %v1675 = vor.u32 %v1671, %v1674
        %v1676 = vrot.slane %v1675, 4
        %v1678 = vshll.u32 %v1453, 16
        %v1680 = vrot.slane %v1678, 5
        %v1681 = vsel %vm280, %v1676, %v1680
        %v1682 = vshrl.u32 %v1453, 16
        %v1684 = vrot.slane %v1682, 4
        %v1685 = vor.u32 %v1684, %v1680
        %v1686 = vrot.slane %v1685, 4
        %v1688 = vshll.u32 %v1454, 16
        %v1690 = vrot.slane %v1688, 5
        %v1691 = vsel %vm280, %v1686, %v1690
        %v1693 = vshrl.u32 %v1455, 16
        %v1695 = vrot.slane %v1693, 4
        %v1696 = vshll.u32 %v1455, 16
        %v1698 = vrot.slane %v1696, 5
        %v1699 = vor.u32 %v1695, %v1698
        %v1700 = vrot.slane %v1699, 4
        %v1702 = vshll.u32 %v1456, 16
        %v1704 = vrot.slane %v1702, 5
        %v1705 = vsel %vm280, %v1700, %v1704
        %v1706 = vshrl.u32 %v1456, 16
        %v1708 = vrot.slane %v1706, 4
        %v1709 = vor.u32 %v1708, %v1704
        %v1710 = vrot.slane %v1709, 4
        %v1712 = vshll.u32 %v1457, 16
        %v1714 = vrot.slane %v1712, 5
        %v1715 = vsel %vm280, %v1710, %v1714
        %v1717 = vshrl.u32 %v1458, 16
        %v1719 = vrot.slane %v1717, 4
        %v1720 = vshll.u32 %v1458, 16
        %v1722 = vrot.slane %v1720, 5
        %v1723 = vor.u32 %v1719, %v1722
        %v1724 = vrot.slane %v1723, 4
        %v1726 = vshll.u32 %v1459, 16
        %v1728 = vrot.slane %v1726, 5
        %v1729 = vsel %vm280, %v1724, %v1728
        %v1730 = vshrl.u32 %v1459, 16
        %v1732 = vrot.slane %v1730, 4
        %v1733 = vor.u32 %v1732, %v1728
        %v1734 = vrot.slane %v1733, 4
        %v1736 = vshll.u32 %v1460, 16
        %v1738 = vrot.slane %v1736, 5
        %v1739 = vsel %vm280, %v1734, %v1738
        %v1741 = vshrl.u32 %v1461, 16
        %v1743 = vrot.slane %v1741, 4
        %v1744 = vshll.u32 %v1461, 16
        %v1746 = vrot.slane %v1744, 5
        %v1747 = vor.u32 %v1743, %v1746
        %v1748 = vrot.slane %v1747, 4
        %v1750 = vshll.u32 %v1462, 16
        %v1752 = vrot.slane %v1750, 5
        %v1753 = vsel %vm280, %v1748, %v1752
        %v1754 = vshrl.u32 %v1462, 16
        %v1756 = vrot.slane %v1754, 4
        %v1757 = vor.u32 %v1756, %v1752
        %v1758 = vrot.slane %v1757, 4
        %v1760 = vshll.u32 %v1463, 16
        %v1762 = vrot.slane %v1760, 5
        %v1763 = vsel %vm280, %v1758, %v1762
        %v1765 = vshrl.u32 %v1464, 16
        %v1767 = vrot.slane %v1765, 4
        %v1768 = vshll.u32 %v1464, 16
        %v1770 = vrot.slane %v1768, 5
        %v1771 = vor.u32 %v1767, %v1770
        %v1772 = vrot.slane %v1771, 4
        %v1774 = vshll.u32 %v1465, 16
        %v1776 = vrot.slane %v1774, 5
        %v1777 = vsel %vm280, %v1772, %v1776
        %v1778 = vshrl.u32 %v1465, 16
        %v1780 = vrot.slane %v1778, 4
        %v1781 = vor.u32 %v1780, %v1776
        %v1782 = vrot.slane %v1781, 4
        %v1784 = vshll.u32 %v1466, 16
        %v1786 = vrot.slane %v1784, 5
        %v1787 = vsel %vm280, %v1782, %v1786
        %v1789 = vshrl.u32 %v1467, 16
        %v1791 = vrot.slane %v1789, 4
        %v1792 = vshll.u32 %v1467, 16
        %v1794 = vrot.slane %v1792, 5
        %v1795 = vor.u32 %v1791, %v1794
        %v1796 = vrot.slane %v1795, 4
        %v1798 = vshll.u32 %v1468, 16
        %v1800 = vrot.slane %v1798, 5
        %v1801 = vsel %vm280, %v1796, %v1800
        %v1802 = vshrl.u32 %v1468, 16
        %v1804 = vrot.slane %v1802, 4
        %v1805 = vor.u32 %v1804, %v1800
        %v1806 = vrot.slane %v1805, 4
        %v1808 = vshll.u32 %v1469, 16
        %v1810 = vrot.slane %v1808, 5
        %v1811 = vsel %vm280, %v1806, %v1810
        %v1813 = vshrl.u32 %v1470, 16
        %v1815 = vrot.slane %v1813, 4
        %v1816 = vshll.u32 %v1470, 16
        %v1818 = vrot.slane %v1816, 5
        %v1819 = vor.u32 %v1815, %v1818
        %v1820 = vrot.slane %v1819, 4
        %v1822 = vshll.u32 %v1471, 16
        %v1824 = vrot.slane %v1822, 5
        %v1825 = vsel %vm280, %v1820, %v1824
        %v1826 = vshrl.u32 %v1471, 16
        %v1828 = vrot.slane %v1826, 4
        %v1829 = vor.u32 %v1828, %v1824
        %v1830 = vrot.slane %v1829, 4
        %v1832 = vshll.u32 %v1472, 16
        %v1834 = vrot.slane %v1832, 5
        %v1835 = vsel %vm280, %v1830, %v1834
        %v1837 = vshrl.u32 %v1473, 16
        %v1839 = vrot.slane %v1837, 4
        %v1840 = vshll.u32 %v1473, 16
        %v1842 = vrot.slane %v1840, 5
        %v1843 = vor.u32 %v1839, %v1842
        %v1844 = vrot.slane %v1843, 4
        %v1846 = vshll.u32 %v1474, 16
        %v1848 = vrot.slane %v1846, 5
        %v1849 = vsel %vm280, %v1844, %v1848
        %v1850 = vshrl.u32 %v1474, 16
        %v1852 = vrot.slane %v1850, 4
        %v1853 = vor.u32 %v1852, %v1848
        %v1854 = vrot.slane %v1853, 4
        %v1856 = vshll.u32 %v1475, 16
        %v1858 = vrot.slane %v1856, 5
        %v1859 = vsel %vm280, %v1854, %v1858
        %v1908 = vrot.slane %v1428, 5
        %v1909 = vrot.slane %v1908, 4
        %v1910 = vrot.slane %v1429, 5
        %v1911 = vsel %vm715, %v1909, %v1910
        %v1912 = vrot.slane %v1910, 4
        %v1913 = vrot.slane %v1430, 5
        %v1914 = vsel %vm715, %v1912, %v1913
        %v1915 = vrot.slane %v1431, 5
        %v1916 = vrot.slane %v1915, 4
        %v1917 = vrot.slane %v1432, 5
        %v1918 = vsel %vm715, %v1916, %v1917
        %v1919 = vrot.slane %v1917, 4
        %v1920 = vrot.slane %v1433, 5
        %v1921 = vsel %vm715, %v1919, %v1920
        %v1922 = vrot.slane %v1434, 5
        %v1923 = vrot.slane %v1922, 4
        %v1924 = vrot.slane %v1435, 5
        %v1925 = vsel %vm715, %v1923, %v1924
        %v1926 = vrot.slane %v1924, 4
        %v1927 = vrot.slane %v1436, 5
        %v1928 = vsel %vm715, %v1926, %v1927
        %v1929 = vrot.slane %v1437, 5
        %v1930 = vrot.slane %v1929, 4
        %v1931 = vrot.slane %v1438, 5
        %v1932 = vsel %vm715, %v1930, %v1931
        %v1933 = vrot.slane %v1931, 4
        %v1934 = vrot.slane %v1439, 5
        %v1935 = vsel %vm715, %v1933, %v1934
        %v1936 = vrot.slane %v1440, 5
        %v1937 = vrot.slane %v1936, 4
        %v1938 = vrot.slane %v1441, 5
        %v1939 = vsel %vm715, %v1937, %v1938
        %v1940 = vrot.slane %v1938, 4
        %v1941 = vrot.slane %v1442, 5
        %v1942 = vsel %vm715, %v1940, %v1941
        %v1943 = vrot.slane %v1443, 5
        %v1944 = vrot.slane %v1943, 4
        %v1945 = vrot.slane %v1444, 5
        %v1946 = vsel %vm715, %v1944, %v1945
        %v1947 = vrot.slane %v1945, 4
        %v1948 = vrot.slane %v1445, 5
        %v1949 = vsel %vm715, %v1947, %v1948
        %v1950 = vrot.slane %v1446, 5
        %v1951 = vrot.slane %v1950, 4
        %v1952 = vrot.slane %v1447, 5
        %v1953 = vsel %vm715, %v1951, %v1952
        %v1954 = vrot.slane %v1952, 4
        %v1955 = vrot.slane %v1448, 5
        %v1956 = vsel %vm715, %v1954, %v1955
        %v1957 = vrot.slane %v1449, 5
        %v1958 = vrot.slane %v1957, 4
        %v1959 = vrot.slane %v1450, 5
        %v1960 = vsel %vm715, %v1958, %v1959
        %v1961 = vrot.slane %v1959, 4
        %v1962 = vrot.slane %v1451, 5
        %v1963 = vsel %vm715, %v1961, %v1962
        %v1964 = vrot.slane %v1452, 5
        %v1965 = vrot.slane %v1964, 4
        %v1966 = vrot.slane %v1453, 5
        %v1967 = vsel %vm715, %v1965, %v1966
        %v1968 = vrot.slane %v1966, 4
        %v1969 = vrot.slane %v1454, 5
        %v1970 = vsel %vm715, %v1968, %v1969
        %v1971 = vrot.slane %v1455, 5
        %v1972 = vrot.slane %v1971, 4
        %v1973 = vrot.slane %v1456, 5
        %v1974 = vsel %vm715, %v1972, %v1973
        %v1975 = vrot.slane %v1973, 4
        %v1976 = vrot.slane %v1457, 5
        %v1977 = vsel %vm715, %v1975, %v1976
        %v1978 = vrot.slane %v1458, 5
        %v1979 = vrot.slane %v1978, 4
        %v1980 = vrot.slane %v1459, 5
        %v1981 = vsel %vm715, %v1979, %v1980
        %v1982 = vrot.slane %v1980, 4
        %v1983 = vrot.slane %v1460, 5
        %v1984 = vsel %vm715, %v1982, %v1983
        %v1985 = vrot.slane %v1461, 5
        %v1986 = vrot.slane %v1985, 4
        %v1987 = vrot.slane %v1462, 5
        %v1988 = vsel %vm715, %v1986, %v1987
        %v1989 = vrot.slane %v1987, 4
        %v1990 = vrot.slane %v1463, 5
        %v1991 = vsel %vm715, %v1989, %v1990
        %v1992 = vrot.slane %v1464, 5
        %v1993 = vrot.slane %v1992, 4
        %v1994 = vrot.slane %v1465, 5
        %v1995 = vsel %vm715, %v1993, %v1994
        %v1996 = vrot.slane %v1994, 4
        %v1997 = vrot.slane %v1466, 5
        %v1998 = vsel %vm715, %v1996, %v1997
        %v1999 = vrot.slane %v1467, 5
        %v2000 = vrot.slane %v1999, 4
        %v2001 = vrot.slane %v1468, 5
        %v2002 = vsel %vm715, %v2000, %v2001
        %v2003 = vrot.slane %v2001, 4
        %v2004 = vrot.slane %v1469, 5
        %v2005 = vsel %vm715, %v2003, %v2004
        %v2006 = vrot.slane %v1470, 5
        %v2007 = vrot.slane %v2006, 4
        %v2008 = vrot.slane %v1471, 5
        %v2009 = vsel %vm715, %v2007, %v2008
        %v2010 = vrot.slane %v2008, 4
        %v2011 = vrot.slane %v1472, 5
        %v2012 = vsel %vm715, %v2010, %v2011
        %v2013 = vrot.slane %v1473, 5
        %v2014 = vrot.slane %v2013, 4
        %v2015 = vrot.slane %v1474, 5
        %v2016 = vsel %vm715, %v2014, %v2015
        %v2017 = vrot.slane %v2015, 4
        %v2018 = vrot.slane %v1475, 5
        %v2019 = vsel %vm715, %v2017, %v2018
        %v2020 = vunpack.c.l.b16 %v230
        %v2021 = vunpack.c.l.b16 %v231
        %v2022 = vunpack.c.l.b16 %v233
        %v2023 = vunpack.c.l.b16 %v234
        %v2024 = vunpack.c.l.b16 %v236
        %v2025 = vunpack.c.l.b16 %v237
        %v2026 = vunpack.c.l.b16 %v239
        %v2027 = vunpack.c.l.b16 %v240
        %v2028 = vunpack.c.l.b16 %v242
        %v2029 = vunpack.c.l.b16 %v243
        %v2030 = vunpack.c.l.b16 %v245
        %v2031 = vunpack.c.l.b16 %v246
        %v2032 = vunpack.c.l.b16 %v248
        %v2033 = vunpack.c.l.b16 %v249
        %v2034 = vunpack.c.l.b16 %v251
        %v2035 = vunpack.c.l.b16 %v252
        %v2036 = vunpack.c.l.b16 %v254
        %v2037 = vunpack.c.l.b16 %v255
        %v2038 = vunpack.c.l.b16 %v257
        %v2039 = vunpack.c.l.b16 %v258
        %v2040 = vunpack.c.l.b16 %v260
        %v2041 = vunpack.c.l.b16 %v261
        %v2042 = vunpack.c.l.b16 %v263
        %v2043 = vunpack.c.l.b16 %v264
        %v2044 = vunpack.c.l.b16 %v266
        %v2045 = vunpack.c.l.b16 %v267
        %v2046 = vunpack.c.l.b16 %v269
        %v2047 = vunpack.c.l.b16 %v270
        %v2048 = vunpack.c.l.b16 %v272
        %v2049 = vunpack.c.l.b16 %v273
        %v2050 = vunpack.c.l.b16 %v275
        %v2051 = vunpack.c.l.b16 %v276
        %v2052 = vpack.c.b16 %v2021, %v2020
        %v2053 = vpack.c.b16 %v2023, %v2022
        %v2054 = vpack.c.b16 %v2025, %v2024
        %v2055 = vpack.c.b16 %v2027, %v2026
        %v2056 = vpack.c.b16 %v2029, %v2028
        %v2057 = vpack.c.b16 %v2031, %v2030
        %v2058 = vpack.c.b16 %v2033, %v2032
        %v2059 = vpack.c.b16 %v2035, %v2034
        %v2060 = vpack.c.b16 %v2037, %v2036
        %v2061 = vpack.c.b16 %v2039, %v2038
        %v2062 = vpack.c.b16 %v2041, %v2040
        %v2063 = vpack.c.b16 %v2043, %v2042
        %v2064 = vpack.c.b16 %v2045, %v2044
        %v2065 = vpack.c.b16 %v2047, %v2046
        %v2066 = vpack.c.b16 %v2049, %v2048
        %v2067 = vpack.c.b16 %v2051, %v2050
        %v2068 = vunpack.c.l.b16 %v294
        %v2069 = vunpack.c.l.b16 %v304
        %v2070 = vunpack.c.l.b16 %v318
        %v2071 = vunpack.c.l.b16 %v328
        %v2072 = vunpack.c.l.b16 %v342
        %v2073 = vunpack.c.l.b16 %v352
        %v2074 = vunpack.c.l.b16 %v366
        %v2075 = vunpack.c.l.b16 %v376
        %v2076 = vunpack.c.l.b16 %v390
        %v2077 = vunpack.c.l.b16 %v400
        %v2078 = vunpack.c.l.b16 %v414
        %v2079 = vunpack.c.l.b16 %v424
        %v2080 = vunpack.c.l.b16 %v438
        %v2081 = vunpack.c.l.b16 %v448
        %v2082 = vunpack.c.l.b16 %v462
        %v2083 = vunpack.c.l.b16 %v472
        %v2084 = vunpack.c.l.b16 %v486
        %v2085 = vunpack.c.l.b16 %v496
        %v2086 = vunpack.c.l.b16 %v510
        %v2087 = vunpack.c.l.b16 %v520
        %v2088 = vunpack.c.l.b16 %v534
        %v2089 = vunpack.c.l.b16 %v544
        %v2090 = vunpack.c.l.b16 %v558
        %v2091 = vunpack.c.l.b16 %v568
        %v2092 = vunpack.c.l.b16 %v582
        %v2093 = vunpack.c.l.b16 %v592
        %v2094 = vunpack.c.l.b16 %v606
        %v2095 = vunpack.c.l.b16 %v616
        %v2096 = vunpack.c.l.b16 %v630
        %v2097 = vunpack.c.l.b16 %v640
        %v2098 = vunpack.c.l.b16 %v654
        %v2099 = vunpack.c.l.b16 %v664
        %v2100 = vpack.c.b16 %v2069, %v2068
        %v2101 = vpack.c.b16 %v2071, %v2070
        %v2102 = vpack.c.b16 %v2073, %v2072
        %v2103 = vpack.c.b16 %v2075, %v2074
        %v2104 = vpack.c.b16 %v2077, %v2076
        %v2105 = vpack.c.b16 %v2079, %v2078
        %v2106 = vpack.c.b16 %v2081, %v2080
        %v2107 = vpack.c.b16 %v2083, %v2082
        %v2108 = vpack.c.b16 %v2085, %v2084
        %v2109 = vpack.c.b16 %v2087, %v2086
        %v2110 = vpack.c.b16 %v2089, %v2088
        %v2111 = vpack.c.b16 %v2091, %v2090
        %v2112 = vpack.c.b16 %v2093, %v2092
        %v2113 = vpack.c.b16 %v2095, %v2094
        %v2114 = vpack.c.b16 %v2097, %v2096
        %v2115 = vpack.c.b16 %v2099, %v2098
        %2116 = vrot.lane.b32.xlu0 %v2100, 4
        %v2117 = vpop.permute.xlu0 %2116
        %2118 = vrot.lane.b32.xlu0 %v2101, 4
        %v2119 = vpop.permute.xlu0 %2118
        %2120 = vrot.lane.b32.xlu0 %v2102, 4
        %v2121 = vpop.permute.xlu0 %2120
        %2122 = vrot.lane.b32.xlu0 %v2103, 4
        %v2123 = vpop.permute.xlu0 %2122
        %2124 = vrot.lane.b32.xlu0 %v2104, 4
        %v2125 = vpop.permute.xlu0 %2124
        %2126 = vrot.lane.b32.xlu0 %v2105, 4
        %v2127 = vpop.permute.xlu0 %2126
        %2128 = vrot.lane.b32.xlu0 %v2106, 4
        %v2129 = vpop.permute.xlu0 %2128
        %2130 = vrot.lane.b32.xlu0 %v2107, 4
        %v2131 = vpop.permute.xlu0 %2130
        %2132 = vrot.lane.b32.xlu0 %v2108, 4
        %v2133 = vpop.permute.xlu0 %2132
        %2134 = vrot.lane.b32.xlu0 %v2109, 4
        %v2135 = vpop.permute.xlu0 %2134
        %2136 = vrot.lane.b32.xlu0 %v2110, 4
        %v2137 = vpop.permute.xlu0 %2136
        %2138 = vrot.lane.b32.xlu0 %v2111, 4
        %v2139 = vpop.permute.xlu0 %2138
        %2140 = vrot.lane.b32.xlu0 %v2112, 4
        %v2141 = vpop.permute.xlu0 %2140
        %2142 = vrot.lane.b32.xlu0 %v2113, 4
        %v2143 = vpop.permute.xlu0 %2142
        %2144 = vrot.lane.b32.xlu0 %v2114, 4
        %v2145 = vpop.permute.xlu0 %2144
        %2146 = vrot.lane.b32.xlu0 %v2115, 4
        %v2147 = vpop.permute.xlu0 %2146
        %v2148 = vunpack.c.l.b16 %v719
        %v2149 = vunpack.c.l.b16 %v722
        %v2150 = vunpack.c.l.b16 %v726
        %v2151 = vunpack.c.l.b16 %v729
        %v2152 = vunpack.c.l.b16 %v733
        %v2153 = vunpack.c.l.b16 %v736
        %v2154 = vunpack.c.l.b16 %v740
        %v2155 = vunpack.c.l.b16 %v743
        %v2156 = vunpack.c.l.b16 %v747
        %v2157 = vunpack.c.l.b16 %v750
        %v2158 = vunpack.c.l.b16 %v754
        %v2159 = vunpack.c.l.b16 %v757
        %v2160 = vunpack.c.l.b16 %v761
        %v2161 = vunpack.c.l.b16 %v764
        %v2162 = vunpack.c.l.b16 %v768
        %v2163 = vunpack.c.l.b16 %v771
        %v2164 = vunpack.c.l.b16 %v775
        %v2165 = vunpack.c.l.b16 %v778
        %v2166 = vunpack.c.l.b16 %v782
        %v2167 = vunpack.c.l.b16 %v785
        %v2168 = vunpack.c.l.b16 %v789
        %v2169 = vunpack.c.l.b16 %v792
        %v2170 = vunpack.c.l.b16 %v796
        %v2171 = vunpack.c.l.b16 %v799
        %v2172 = vunpack.c.l.b16 %v803
        %v2173 = vunpack.c.l.b16 %v806
        %v2174 = vunpack.c.l.b16 %v810
        %v2175 = vunpack.c.l.b16 %v813
        %v2176 = vunpack.c.l.b16 %v817
        %v2177 = vunpack.c.l.b16 %v820
        %v2178 = vunpack.c.l.b16 %v824
        %v2179 = vunpack.c.l.b16 %v827
        %v2180 = vpack.c.b16 %v2149, %v2148
        %v2181 = vpack.c.b16 %v2151, %v2150
        %v2182 = vpack.c.b16 %v2153, %v2152
        %v2183 = vpack.c.b16 %v2155, %v2154
        %v2184 = vpack.c.b16 %v2157, %v2156
        %v2185 = vpack.c.b16 %v2159, %v2158
        %v2186 = vpack.c.b16 %v2161, %v2160
        %v2187 = vpack.c.b16 %v2163, %v2162
        %v2188 = vpack.c.b16 %v2165, %v2164
        %v2189 = vpack.c.b16 %v2167, %v2166
        %v2190 = vpack.c.b16 %v2169, %v2168
        %v2191 = vpack.c.b16 %v2171, %v2170
        %v2192 = vpack.c.b16 %v2173, %v2172
        %v2193 = vpack.c.b16 %v2175, %v2174
        %v2194 = vpack.c.b16 %v2177, %v2176
        %v2195 = vpack.c.b16 %v2179, %v2178
        %2196 = vrot.lane.b32.xlu0 %v2180, 8
        %v2197 = vpop.permute.xlu0 %2196
        %2198 = vrot.lane.b32.xlu0 %v2181, 8
        %v2199 = vpop.permute.xlu0 %2198
        %2200 = vrot.lane.b32.xlu0 %v2182, 8
        %v2201 = vpop.permute.xlu0 %2200
        %2202 = vrot.lane.b32.xlu0 %v2183, 8
        %v2203 = vpop.permute.xlu0 %2202
        %2204 = vrot.lane.b32.xlu0 %v2184, 8
        %v2205 = vpop.permute.xlu0 %2204
        %2206 = vrot.lane.b32.xlu0 %v2185, 8
        %v2207 = vpop.permute.xlu0 %2206
        %2208 = vrot.lane.b32.xlu0 %v2186, 8
        %v2209 = vpop.permute.xlu0 %2208
        %2210 = vrot.lane.b32.xlu0 %v2187, 8
        %v2211 = vpop.permute.xlu0 %2210
        %2212 = vrot.lane.b32.xlu0 %v2188, 8
        %v2213 = vpop.permute.xlu0 %2212
        %2214 = vrot.lane.b32.xlu0 %v2189, 8
        %v2215 = vpop.permute.xlu0 %2214
        %2216 = vrot.lane.b32.xlu0 %v2190, 8
        %v2217 = vpop.permute.xlu0 %2216
        %2218 = vrot.lane.b32.xlu0 %v2191, 8
        %v2219 = vpop.permute.xlu0 %2218
        %2220 = vrot.lane.b32.xlu0 %v2192, 8
        %v2221 = vpop.permute.xlu0 %2220
        %2222 = vrot.lane.b32.xlu0 %v2193, 8
        %v2223 = vpop.permute.xlu0 %2222
        %2224 = vrot.lane.b32.xlu0 %v2194, 8
        %v2225 = vpop.permute.xlu0 %2224
        %2226 = vrot.lane.b32.xlu0 %v2195, 8
        %v2227 = vpop.permute.xlu0 %2226
        %v2228 = vunpack.c.l.b16 %v832
        %v2229 = vunpack.c.l.b16 %v833
        %v2230 = vunpack.c.l.b16 %v835
        %v2231 = vunpack.c.l.b16 %v836
        %v2232 = vunpack.c.l.b16 %v838
        %v2233 = vunpack.c.l.b16 %v839
        %v2234 = vunpack.c.l.b16 %v841
        %v2235 = vunpack.c.l.b16 %v842
        %v2236 = vunpack.c.l.b16 %v844
        %v2237 = vunpack.c.l.b16 %v845
        %v2238 = vunpack.c.l.b16 %v847
        %v2239 = vunpack.c.l.b16 %v848
        %v2240 = vunpack.c.l.b16 %v850
        %v2241 = vunpack.c.l.b16 %v851
        %v2242 = vunpack.c.l.b16 %v853
        %v2243 = vunpack.c.l.b16 %v854
        %v2244 = vunpack.c.l.b16 %v856
        %v2245 = vunpack.c.l.b16 %v857
        %v2246 = vunpack.c.l.b16 %v859
        %v2247 = vunpack.c.l.b16 %v860
        %v2248 = vunpack.c.l.b16 %v862
        %v2249 = vunpack.c.l.b16 %v863
        %v2250 = vunpack.c.l.b16 %v865
        %v2251 = vunpack.c.l.b16 %v866
        %v2252 = vunpack.c.l.b16 %v868
        %v2253 = vunpack.c.l.b16 %v869
        %v2254 = vunpack.c.l.b16 %v871
        %v2255 = vunpack.c.l.b16 %v872
        %v2256 = vunpack.c.l.b16 %v874
        %v2257 = vunpack.c.l.b16 %v875
        %v2258 = vunpack.c.l.b16 %v877
        %v2259 = vunpack.c.l.b16 %v878
        %v2260 = vpack.c.b16 %v2229, %v2228
        %v2261 = vpack.c.b16 %v2231, %v2230
        %v2262 = vpack.c.b16 %v2233, %v2232
        %v2263 = vpack.c.b16 %v2235, %v2234
        %v2264 = vpack.c.b16 %v2237, %v2236
        %v2265 = vpack.c.b16 %v2239, %v2238
        %v2266 = vpack.c.b16 %v2241, %v2240
        %v2267 = vpack.c.b16 %v2243, %v2242
        %v2268 = vpack.c.b16 %v2245, %v2244
        %v2269 = vpack.c.b16 %v2247, %v2246
        %v2270 = vpack.c.b16 %v2249, %v2248
        %v2271 = vpack.c.b16 %v2251, %v2250
        %v2272 = vpack.c.b16 %v2253, %v2252
        %v2273 = vpack.c.b16 %v2255, %v2254
        %v2274 = vpack.c.b16 %v2257, %v2256
        %v2275 = vpack.c.b16 %v2259, %v2258
        %2276 = vrot.lane.b32.xlu0 %v2260, 12
        %v2277 = vpop.permute.xlu0 %2276
        %2278 = vrot.lane.b32.xlu0 %v2261, 12
        %v2279 = vpop.permute.xlu0 %2278
        %2280 = vrot.lane.b32.xlu0 %v2262, 12
        %v2281 = vpop.permute.xlu0 %2280
        %2282 = vrot.lane.b32.xlu0 %v2263, 12
        %v2283 = vpop.permute.xlu0 %2282
        %2284 = vrot.lane.b32.xlu0 %v2264, 12
        %v2285 = vpop.permute.xlu0 %2284
        %2286 = vrot.lane.b32.xlu0 %v2265, 12
        %v2287 = vpop.permute.xlu0 %2286
        %2288 = vrot.lane.b32.xlu0 %v2266, 12
        %v2289 = vpop.permute.xlu0 %2288
        %2290 = vrot.lane.b32.xlu0 %v2267, 12
        %v2291 = vpop.permute.xlu0 %2290
        %2292 = vrot.lane.b32.xlu0 %v2268, 12
        %v2293 = vpop.permute.xlu0 %2292
        %2294 = vrot.lane.b32.xlu0 %v2269, 12
        %v2295 = vpop.permute.xlu0 %2294
        %2296 = vrot.lane.b32.xlu0 %v2270, 12
        %v2297 = vpop.permute.xlu0 %2296
        %2298 = vrot.lane.b32.xlu0 %v2271, 12
        %v2299 = vpop.permute.xlu0 %2298
        %2300 = vrot.lane.b32.xlu0 %v2272, 12
        %v2301 = vpop.permute.xlu0 %2300
        %2302 = vrot.lane.b32.xlu0 %v2273, 12
        %v2303 = vpop.permute.xlu0 %2302
        %2304 = vrot.lane.b32.xlu0 %v2274, 12
        %v2305 = vpop.permute.xlu0 %2304
        %2306 = vrot.lane.b32.xlu0 %v2275, 12
        %v2307 = vpop.permute.xlu0 %2306
        %v2308 = vunpack.c.l.b16 %v893
        %v2309 = vunpack.c.l.b16 %v903
        %v2310 = vunpack.c.l.b16 %v917
        %v2311 = vunpack.c.l.b16 %v927
        %v2312 = vunpack.c.l.b16 %v941
        %v2313 = vunpack.c.l.b16 %v951
        %v2314 = vunpack.c.l.b16 %v965
        %v2315 = vunpack.c.l.b16 %v975
        %v2316 = vunpack.c.l.b16 %v989
        %v2317 = vunpack.c.l.b16 %v999
        %v2318 = vunpack.c.l.b16 %v1013
        %v2319 = vunpack.c.l.b16 %v1023
        %v2320 = vunpack.c.l.b16 %v1037
        %v2321 = vunpack.c.l.b16 %v1047
        %v2322 = vunpack.c.l.b16 %v1061
        %v2323 = vunpack.c.l.b16 %v1071
        %v2324 = vunpack.c.l.b16 %v1085
        %v2325 = vunpack.c.l.b16 %v1095
        %v2326 = vunpack.c.l.b16 %v1109
        %v2327 = vunpack.c.l.b16 %v1119
        %v2328 = vunpack.c.l.b16 %v1133
        %v2329 = vunpack.c.l.b16 %v1143
        %v2330 = vunpack.c.l.b16 %v1157
        %v2331 = vunpack.c.l.b16 %v1167
        %v2332 = vunpack.c.l.b16 %v1181
        %v2333 = vunpack.c.l.b16 %v1191
        %v2334 = vunpack.c.l.b16 %v1205
        %v2335 = vunpack.c.l.b16 %v1215
        %v2336 = vunpack.c.l.b16 %v1229
        %v2337 = vunpack.c.l.b16 %v1239
        %v2338 = vunpack.c.l.b16 %v1253
        %v2339 = vunpack.c.l.b16 %v1263
        %v2340 = vpack.c.b16 %v2309, %v2308
        %v2341 = vpack.c.b16 %v2311, %v2310
        %v2342 = vpack.c.b16 %v2313, %v2312
        %v2343 = vpack.c.b16 %v2315, %v2314
        %v2344 = vpack.c.b16 %v2317, %v2316
        %v2345 = vpack.c.b16 %v2319, %v2318
        %v2346 = vpack.c.b16 %v2321, %v2320
        %v2347 = vpack.c.b16 %v2323, %v2322
        %v2348 = vpack.c.b16 %v2325, %v2324
        %v2349 = vpack.c.b16 %v2327, %v2326
        %v2350 = vpack.c.b16 %v2329, %v2328
        %v2351 = vpack.c.b16 %v2331, %v2330
        %v2352 = vpack.c.b16 %v2333, %v2332
        %v2353 = vpack.c.b16 %v2335, %v2334
        %v2354 = vpack.c.b16 %v2337, %v2336
        %v2355 = vpack.c.b16 %v2339, %v2338
        %2356 = vrot.lane.b32.xlu0 %v2340, 16
        %v2357 = vpop.permute.xlu0 %2356
        %2358 = vrot.lane.b32.xlu0 %v2341, 16
        %v2359 = vpop.permute.xlu0 %2358
        %2360 = vrot.lane.b32.xlu0 %v2342, 16
        %v2361 = vpop.permute.xlu0 %2360
        %2362 = vrot.lane.b32.xlu0 %v2343, 16
        %v2363 = vpop.permute.xlu0 %2362
        %2364 = vrot.lane.b32.xlu0 %v2344, 16
        %v2365 = vpop.permute.xlu0 %2364
        %2366 = vrot.lane.b32.xlu0 %v2345, 16
        %v2367 = vpop.permute.xlu0 %2366
        %2368 = vrot.lane.b32.xlu0 %v2346, 16
        %v2369 = vpop.permute.xlu0 %2368
        %2370 = vrot.lane.b32.xlu0 %v2347, 16
        %v2371 = vpop.permute.xlu0 %2370
        %2372 = vrot.lane.b32.xlu0 %v2348, 16
        %v2373 = vpop.permute.xlu0 %2372
        %2374 = vrot.lane.b32.xlu0 %v2349, 16
        %v2375 = vpop.permute.xlu0 %2374
        %2376 = vrot.lane.b32.xlu0 %v2350, 16
        %v2377 = vpop.permute.xlu0 %2376
        %2378 = vrot.lane.b32.xlu0 %v2351, 16
        %v2379 = vpop.permute.xlu0 %2378
        %2380 = vrot.lane.b32.xlu0 %v2352, 16
        %v2381 = vpop.permute.xlu0 %2380
        %2382 = vrot.lane.b32.xlu0 %v2353, 16
        %v2383 = vpop.permute.xlu0 %2382
        %2384 = vrot.lane.b32.xlu0 %v2354, 16
        %v2385 = vpop.permute.xlu0 %2384
        %2386 = vrot.lane.b32.xlu0 %v2355, 16
        %v2387 = vpop.permute.xlu0 %2386
        %v2388 = vunpack.c.l.b16 %v1315
        %v2389 = vunpack.c.l.b16 %v1318
        %v2390 = vunpack.c.l.b16 %v1322
        %v2391 = vunpack.c.l.b16 %v1325
        %v2392 = vunpack.c.l.b16 %v1329
        %v2393 = vunpack.c.l.b16 %v1332
        %v2394 = vunpack.c.l.b16 %v1336
        %v2395 = vunpack.c.l.b16 %v1339
        %v2396 = vunpack.c.l.b16 %v1343
        %v2397 = vunpack.c.l.b16 %v1346
        %v2398 = vunpack.c.l.b16 %v1350
        %v2399 = vunpack.c.l.b16 %v1353
        %v2400 = vunpack.c.l.b16 %v1357
        %v2401 = vunpack.c.l.b16 %v1360
        %v2402 = vunpack.c.l.b16 %v1364
        %v2403 = vunpack.c.l.b16 %v1367
        %v2404 = vunpack.c.l.b16 %v1371
        %v2405 = vunpack.c.l.b16 %v1374
        %v2406 = vunpack.c.l.b16 %v1378
        %v2407 = vunpack.c.l.b16 %v1381
        %v2408 = vunpack.c.l.b16 %v1385
        %v2409 = vunpack.c.l.b16 %v1388
        %v2410 = vunpack.c.l.b16 %v1392
        %v2411 = vunpack.c.l.b16 %v1395
        %v2412 = vunpack.c.l.b16 %v1399
        %v2413 = vunpack.c.l.b16 %v1402
        %v2414 = vunpack.c.l.b16 %v1406
        %v2415 = vunpack.c.l.b16 %v1409
        %v2416 = vunpack.c.l.b16 %v1413
        %v2417 = vunpack.c.l.b16 %v1416
        %v2418 = vunpack.c.l.b16 %v1420
        %v2419 = vunpack.c.l.b16 %v1423
        %v2420 = vpack.c.b16 %v2389, %v2388
        %v2421 = vpack.c.b16 %v2391, %v2390
        %v2422 = vpack.c.b16 %v2393, %v2392
        %v2423 = vpack.c.b16 %v2395, %v2394
        %v2424 = vpack.c.b16 %v2397, %v2396
        %v2425 = vpack.c.b16 %v2399, %v2398
        %v2426 = vpack.c.b16 %v2401, %v2400
        %v2427 = vpack.c.b16 %v2403, %v2402
        %v2428 = vpack.c.b16 %v2405, %v2404
        %v2429 = vpack.c.b16 %v2407, %v2406
        %v2430 = vpack.c.b16 %v2409, %v2408
        %v2431 = vpack.c.b16 %v2411, %v2410
        %v2432 = vpack.c.b16 %v2413, %v2412
        %v2433 = vpack.c.b16 %v2415, %v2414
        %v2434 = vpack.c.b16 %v2417, %v2416
        %v2435 = vpack.c.b16 %v2419, %v2418
        %2436 = vrot.lane.b32.xlu0 %v2420, 20
        %v2437 = vpop.permute.xlu0 %2436
        %2438 = vrot.lane.b32.xlu0 %v2421, 20
        %v2439 = vpop.permute.xlu0 %2438
        %2440 = vrot.lane.b32.xlu0 %v2422, 20
        %v2441 = vpop.permute.xlu0 %2440
        %2442 = vrot.lane.b32.xlu0 %v2423, 20
        %v2443 = vpop.permute.xlu0 %2442
        %2444 = vrot.lane.b32.xlu0 %v2424, 20
        %v2445 = vpop.permute.xlu0 %2444
        %2446 = vrot.lane.b32.xlu0 %v2425, 20
        %v2447 = vpop.permute.xlu0 %2446
        %2448 = vrot.lane.b32.xlu0 %v2426, 20
        %v2449 = vpop.permute.xlu0 %2448
        %2450 = vrot.lane.b32.xlu0 %v2427, 20
        %v2451 = vpop.permute.xlu0 %2450
        %2452 = vrot.lane.b32.xlu0 %v2428, 20
        %v2453 = vpop.permute.xlu0 %2452
        %2454 = vrot.lane.b32.xlu0 %v2429, 20
        %v2455 = vpop.permute.xlu0 %2454
        %2456 = vrot.lane.b32.xlu0 %v2430, 20
        %v2457 = vpop.permute.xlu0 %2456
        %2458 = vrot.lane.b32.xlu0 %v2431, 20
        %v2459 = vpop.permute.xlu0 %2458
        %2460 = vrot.lane.b32.xlu0 %v2432, 20
        %v2461 = vpop.permute.xlu0 %2460
        %2462 = vrot.lane.b32.xlu0 %v2433, 20
        %v2463 = vpop.permute.xlu0 %2462
        %2464 = vrot.lane.b32.xlu0 %v2434, 20
        %v2465 = vpop.permute.xlu0 %2464
        %2466 = vrot.lane.b32.xlu0 %v2435, 20
        %v2467 = vpop.permute.xlu0 %2466
        %v2468 = vunpack.c.l.b16 %v1428
        %v2469 = vunpack.c.l.b16 %v1429
        %v2470 = vunpack.c.l.b16 %v1431
        %v2471 = vunpack.c.l.b16 %v1432
        %v2472 = vunpack.c.l.b16 %v1434
        %v2473 = vunpack.c.l.b16 %v1435
        %v2474 = vunpack.c.l.b16 %v1437
        %v2475 = vunpack.c.l.b16 %v1438
        %v2476 = vunpack.c.l.b16 %v1440
        %v2477 = vunpack.c.l.b16 %v1441
        %v2478 = vunpack.c.l.b16 %v1443
        %v2479 = vunpack.c.l.b16 %v1444
        %v2480 = vunpack.c.l.b16 %v1446
        %v2481 = vunpack.c.l.b16 %v1447
        %v2482 = vunpack.c.l.b16 %v1449
        %v2483 = vunpack.c.l.b16 %v1450
        %v2484 = vunpack.c.l.b16 %v1452
        %v2485 = vunpack.c.l.b16 %v1453
        %v2486 = vunpack.c.l.b16 %v1455
        %v2487 = vunpack.c.l.b16 %v1456
        %v2488 = vunpack.c.l.b16 %v1458
        %v2489 = vunpack.c.l.b16 %v1459
        %v2490 = vunpack.c.l.b16 %v1461
        %v2491 = vunpack.c.l.b16 %v1462
        %v2492 = vunpack.c.l.b16 %v1464
        %v2493 = vunpack.c.l.b16 %v1465
        %v2494 = vunpack.c.l.b16 %v1467
        %v2495 = vunpack.c.l.b16 %v1468
        %v2496 = vunpack.c.l.b16 %v1470
        %v2497 = vunpack.c.l.b16 %v1471
        %v2498 = vunpack.c.l.b16 %v1473
        %v2499 = vunpack.c.l.b16 %v1474
        %v2500 = vpack.c.b16 %v2469, %v2468
        %v2501 = vpack.c.b16 %v2471, %v2470
        %v2502 = vpack.c.b16 %v2473, %v2472
        %v2503 = vpack.c.b16 %v2475, %v2474
        %v2504 = vpack.c.b16 %v2477, %v2476
        %v2505 = vpack.c.b16 %v2479, %v2478
        %v2506 = vpack.c.b16 %v2481, %v2480
        %v2507 = vpack.c.b16 %v2483, %v2482
        %v2508 = vpack.c.b16 %v2485, %v2484
        %v2509 = vpack.c.b16 %v2487, %v2486
        %v2510 = vpack.c.b16 %v2489, %v2488
        %v2511 = vpack.c.b16 %v2491, %v2490
        %v2512 = vpack.c.b16 %v2493, %v2492
        %v2513 = vpack.c.b16 %v2495, %v2494
        %v2514 = vpack.c.b16 %v2497, %v2496
        %v2515 = vpack.c.b16 %v2499, %v2498
        %2516 = vrot.lane.b32.xlu0 %v2500, 24
        %v2517 = vpop.permute.xlu0 %2516
        %2518 = vrot.lane.b32.xlu0 %v2501, 24
        %v2519 = vpop.permute.xlu0 %2518
        %2520 = vrot.lane.b32.xlu0 %v2502, 24
        %v2521 = vpop.permute.xlu0 %2520
        %2522 = vrot.lane.b32.xlu0 %v2503, 24
        %v2523 = vpop.permute.xlu0 %2522
        %2524 = vrot.lane.b32.xlu0 %v2504, 24
        %v2525 = vpop.permute.xlu0 %2524
        %2526 = vrot.lane.b32.xlu0 %v2505, 24
        %v2527 = vpop.permute.xlu0 %2526
        %2528 = vrot.lane.b32.xlu0 %v2506, 24
        %v2529 = vpop.permute.xlu0 %2528
        %2530 = vrot.lane.b32.xlu0 %v2507, 24
        %v2531 = vpop.permute.xlu0 %2530
        %2532 = vrot.lane.b32.xlu0 %v2508, 24
        %v2533 = vpop.permute.xlu0 %2532
        %2534 = vrot.lane.b32.xlu0 %v2509, 24
        %v2535 = vpop.permute.xlu0 %2534
        %2536 = vrot.lane.b32.xlu0 %v2510, 24
        %v2537 = vpop.permute.xlu0 %2536
        %2538 = vrot.lane.b32.xlu0 %v2511, 24
        %v2539 = vpop.permute.xlu0 %2538
        %2540 = vrot.lane.b32.xlu0 %v2512, 24
        %v2541 = vpop.permute.xlu0 %2540
        %2542 = vrot.lane.b32.xlu0 %v2513, 24
        %v2543 = vpop.permute.xlu0 %2542
        %2544 = vrot.lane.b32.xlu0 %v2514, 24
        %v2545 = vpop.permute.xlu0 %2544
        %2546 = vrot.lane.b32.xlu0 %v2515, 24
        %v2547 = vpop.permute.xlu0 %2546
        %v2548 = vunpack.c.l.b16 %v1489
        %v2549 = vunpack.c.l.b16 %v1499
        %v2550 = vunpack.c.l.b16 %v1513
        %v2551 = vunpack.c.l.b16 %v1523
        %v2552 = vunpack.c.l.b16 %v1537
        %v2553 = vunpack.c.l.b16 %v1547
        %v2554 = vunpack.c.l.b16 %v1561
        %v2555 = vunpack.c.l.b16 %v1571
        %v2556 = vunpack.c.l.b16 %v1585
        %v2557 = vunpack.c.l.b16 %v1595
        %v2558 = vunpack.c.l.b16 %v1609
        %v2559 = vunpack.c.l.b16 %v1619
        %v2560 = vunpack.c.l.b16 %v1633
        %v2561 = vunpack.c.l.b16 %v1643
        %v2562 = vunpack.c.l.b16 %v1657
        %v2563 = vunpack.c.l.b16 %v1667
        %v2564 = vunpack.c.l.b16 %v1681
        %v2565 = vunpack.c.l.b16 %v1691
        %v2566 = vunpack.c.l.b16 %v1705
        %v2567 = vunpack.c.l.b16 %v1715
        %v2568 = vunpack.c.l.b16 %v1729
        %v2569 = vunpack.c.l.b16 %v1739
        %v2570 = vunpack.c.l.b16 %v1753
        %v2571 = vunpack.c.l.b16 %v1763
        %v2572 = vunpack.c.l.b16 %v1777
        %v2573 = vunpack.c.l.b16 %v1787
        %v2574 = vunpack.c.l.b16 %v1801
        %v2575 = vunpack.c.l.b16 %v1811
        %v2576 = vunpack.c.l.b16 %v1825
        %v2577 = vunpack.c.l.b16 %v1835
        %v2578 = vunpack.c.l.b16 %v1849
        %v2579 = vunpack.c.l.b16 %v1859
        %v2580 = vpack.c.b16 %v2549, %v2548
        %v2581 = vpack.c.b16 %v2551, %v2550
        %v2582 = vpack.c.b16 %v2553, %v2552
        %v2583 = vpack.c.b16 %v2555, %v2554
        %v2584 = vpack.c.b16 %v2557, %v2556
        %v2585 = vpack.c.b16 %v2559, %v2558
        %v2586 = vpack.c.b16 %v2561, %v2560
        %v2587 = vpack.c.b16 %v2563, %v2562
        %v2588 = vpack.c.b16 %v2565, %v2564
        %v2589 = vpack.c.b16 %v2567, %v2566
        %v2590 = vpack.c.b16 %v2569, %v2568
        %v2591 = vpack.c.b16 %v2571, %v2570
        %v2592 = vpack.c.b16 %v2573, %v2572
        %v2593 = vpack.c.b16 %v2575, %v2574
        %v2594 = vpack.c.b16 %v2577, %v2576
        %v2595 = vpack.c.b16 %v2579, %v2578
        %2596 = vrot.lane.b32.xlu0 %v2580, 28
        %v2597 = vpop.permute.xlu0 %2596
        %2598 = vrot.lane.b32.xlu0 %v2581, 28
        %v2599 = vpop.permute.xlu0 %2598
        %2600 = vrot.lane.b32.xlu0 %v2582, 28
        %v2601 = vpop.permute.xlu0 %2600
        %2602 = vrot.lane.b32.xlu0 %v2583, 28
        %v2603 = vpop.permute.xlu0 %2602
        %2604 = vrot.lane.b32.xlu0 %v2584, 28
        %v2605 = vpop.permute.xlu0 %2604
        %2606 = vrot.lane.b32.xlu0 %v2585, 28
        %v2607 = vpop.permute.xlu0 %2606
        %2608 = vrot.lane.b32.xlu0 %v2586, 28
        %v2609 = vpop.permute.xlu0 %2608
        %2610 = vrot.lane.b32.xlu0 %v2587, 28
        %v2611 = vpop.permute.xlu0 %2610
        %2612 = vrot.lane.b32.xlu0 %v2588, 28
        %v2613 = vpop.permute.xlu0 %2612
        %2614 = vrot.lane.b32.xlu0 %v2589, 28
        %v2615 = vpop.permute.xlu0 %2614
        %2616 = vrot.lane.b32.xlu0 %v2590, 28
        %v2617 = vpop.permute.xlu0 %2616
        %2618 = vrot.lane.b32.xlu0 %v2591, 28
        %v2619 = vpop.permute.xlu0 %2618
        %2620 = vrot.lane.b32.xlu0 %v2592, 28
        %v2621 = vpop.permute.xlu0 %2620
        %2622 = vrot.lane.b32.xlu0 %v2593, 28
        %v2623 = vpop.permute.xlu0 %2622
        %2624 = vrot.lane.b32.xlu0 %v2594, 28
        %v2625 = vpop.permute.xlu0 %2624
        %2626 = vrot.lane.b32.xlu0 %v2595, 28
        %v2627 = vpop.permute.xlu0 %2626
        %v2628 = vunpack.c.l.b16 %v1911
        %v2629 = vunpack.c.l.b16 %v1914
        %v2630 = vunpack.c.l.b16 %v1918
        %v2631 = vunpack.c.l.b16 %v1921
        %v2632 = vunpack.c.l.b16 %v1925
        %v2633 = vunpack.c.l.b16 %v1928
        %v2634 = vunpack.c.l.b16 %v1932
        %v2635 = vunpack.c.l.b16 %v1935
        %v2636 = vunpack.c.l.b16 %v1939
        %v2637 = vunpack.c.l.b16 %v1942
        %v2638 = vunpack.c.l.b16 %v1946
        %v2639 = vunpack.c.l.b16 %v1949
        %v2640 = vunpack.c.l.b16 %v1953
        %v2641 = vunpack.c.l.b16 %v1956
        %v2642 = vunpack.c.l.b16 %v1960
        %v2643 = vunpack.c.l.b16 %v1963
        %v2644 = vunpack.c.l.b16 %v1967
        %v2645 = vunpack.c.l.b16 %v1970
        %v2646 = vunpack.c.l.b16 %v1974
        %v2647 = vunpack.c.l.b16 %v1977
        %v2648 = vunpack.c.l.b16 %v1981
        %v2649 = vunpack.c.l.b16 %v1984
        %v2650 = vunpack.c.l.b16 %v1988
        %v2651 = vunpack.c.l.b16 %v1991
        %v2652 = vunpack.c.l.b16 %v1995
        %v2653 = vunpack.c.l.b16 %v1998
        %v2654 = vunpack.c.l.b16 %v2002
        %v2655 = vunpack.c.l.b16 %v2005
        %v2656 = vunpack.c.l.b16 %v2009
        %v2657 = vunpack.c.l.b16 %v2012
        %v2658 = vunpack.c.l.b16 %v2016
        %v2659 = vunpack.c.l.b16 %v2019
        %v2660 = vpack.c.b16 %v2629, %v2628
        %v2661 = vpack.c.b16 %v2631, %v2630
        %v2662 = vpack.c.b16 %v2633, %v2632
        %v2663 = vpack.c.b16 %v2635, %v2634
        %v2664 = vpack.c.b16 %v2637, %v2636
        %v2665 = vpack.c.b16 %v2639, %v2638
        %v2666 = vpack.c.b16 %v2641, %v2640
        %v2667 = vpack.c.b16 %v2643, %v2642
        %v2668 = vpack.c.b16 %v2645, %v2644
        %v2669 = vpack.c.b16 %v2647, %v2646
        %v2670 = vpack.c.b16 %v2649, %v2648
        %v2671 = vpack.c.b16 %v2651, %v2650
        %v2672 = vpack.c.b16 %v2653, %v2652
        %v2673 = vpack.c.b16 %v2655, %v2654
        %v2674 = vpack.c.b16 %v2657, %v2656
        %v2675 = vpack.c.b16 %v2659, %v2658
        %2676 = vrot.lane.b32.xlu0 %v2660, 32
        %v2677 = vpop.permute.xlu0 %2676
        %2678 = vrot.lane.b32.xlu0 %v2661, 32
        %v2679 = vpop.permute.xlu0 %2678
        %2680 = vrot.lane.b32.xlu0 %v2662, 32
        %v2681 = vpop.permute.xlu0 %2680
        %2682 = vrot.lane.b32.xlu0 %v2663, 32
        %v2683 = vpop.permute.xlu0 %2682
        %2684 = vrot.lane.b32.xlu0 %v2664, 32
        %v2685 = vpop.permute.xlu0 %2684
        %2686 = vrot.lane.b32.xlu0 %v2665, 32
        %v2687 = vpop.permute.xlu0 %2686
        %2688 = vrot.lane.b32.xlu0 %v2666, 32
        %v2689 = vpop.permute.xlu0 %2688
        %2690 = vrot.lane.b32.xlu0 %v2667, 32
        %v2691 = vpop.permute.xlu0 %2690
        %2692 = vrot.lane.b32.xlu0 %v2668, 32
        %v2693 = vpop.permute.xlu0 %2692
        %2694 = vrot.lane.b32.xlu0 %v2669, 32
        %v2695 = vpop.permute.xlu0 %2694
        %2696 = vrot.lane.b32.xlu0 %v2670, 32
        %v2697 = vpop.permute.xlu0 %2696
        %2698 = vrot.lane.b32.xlu0 %v2671, 32
        %v2699 = vpop.permute.xlu0 %2698
        %2700 = vrot.lane.b32.xlu0 %v2672, 32
        %v2701 = vpop.permute.xlu0 %2700
        %2702 = vrot.lane.b32.xlu0 %v2673, 32
        %v2703 = vpop.permute.xlu0 %2702
        %2704 = vrot.lane.b32.xlu0 %v2674, 32
        %v2705 = vpop.permute.xlu0 %2704
        %2706 = vrot.lane.b32.xlu0 %v2675, 32
        %v2707 = vpop.permute.xlu0 %2706
        %vm2708 = vcmask 31744
        %v2711 = vsel %vm2708, %v2052, %v2117
        %v2714 = vsel %vm2708, %v2053, %v2119
        %v2717 = vsel %vm2708, %v2054, %v2121
        %v2720 = vsel %vm2708, %v2055, %v2123
        %v2723 = vsel %vm2708, %v2056, %v2125
        %v2726 = vsel %vm2708, %v2057, %v2127
        %v2729 = vsel %vm2708, %v2058, %v2129
        %v2732 = vsel %vm2708, %v2059, %v2131
        %v2735 = vsel %vm2708, %v2060, %v2133
        %v2738 = vsel %vm2708, %v2061, %v2135
        %v2741 = vsel %vm2708, %v2062, %v2137
        %v2744 = vsel %vm2708, %v2063, %v2139
        %v2747 = vsel %vm2708, %v2064, %v2141
        %v2750 = vsel %vm2708, %v2065, %v2143
        %v2753 = vsel %vm2708, %v2066, %v2145
        %v2756 = vsel %vm2708, %v2067, %v2147
        %vm2757 = vcmask 64512
        %v2759 = vsel %vm2757, %v2711, %v2197
        %v2761 = vsel %vm2757, %v2714, %v2199
        %v2763 = vsel %vm2757, %v2717, %v2201
        %v2765 = vsel %vm2757, %v2720, %v2203
        %v2767 = vsel %vm2757, %v2723, %v2205
        %v2769 = vsel %vm2757, %v2726, %v2207
        %v2771 = vsel %vm2757, %v2729, %v2209
        %v2773 = vsel %vm2757, %v2732, %v2211
        %v2775 = vsel %vm2757, %v2735, %v2213
        %v2777 = vsel %vm2757, %v2738, %v2215
        %v2779 = vsel %vm2757, %v2741, %v2217
        %v2781 = vsel %vm2757, %v2744, %v2219
        %v2783 = vsel %vm2757, %v2747, %v2221
        %v2785 = vsel %vm2757, %v2750, %v2223
        %v2787 = vsel %vm2757, %v2753, %v2225
        %v2789 = vsel %vm2757, %v2756, %v2227
        %vm2790 = vcmask 97280
        %v2792 = vsel %vm2790, %v2759, %v2277
        %v2794 = vsel %vm2790, %v2761, %v2279
        %v2796 = vsel %vm2790, %v2763, %v2281
        %v2798 = vsel %vm2790, %v2765, %v2283
        %v2800 = vsel %vm2790, %v2767, %v2285
        %v2802 = vsel %vm2790, %v2769, %v2287
        %v2804 = vsel %vm2790, %v2771, %v2289
        %v2806 = vsel %vm2790, %v2773, %v2291
        %v2808 = vsel %vm2790, %v2775, %v2293
        %v2810 = vsel %vm2790, %v2777, %v2295
        %v2812 = vsel %vm2790, %v2779, %v2297
        %v2814 = vsel %vm2790, %v2781, %v2299
        %v2816 = vsel %vm2790, %v2783, %v2301
        %v2818 = vsel %vm2790, %v2785, %v2303
        %v2820 = vsel %vm2790, %v2787, %v2305
        %v2822 = vsel %vm2790, %v2789, %v2307
        %vm2823 = vcmask 130048
        %v2825 = vsel %vm2823, %v2792, %v2357
        %v2827 = vsel %vm2823, %v2794, %v2359
        %v2829 = vsel %vm2823, %v2796, %v2361
        %v2831 = vsel %vm2823, %v2798, %v2363
        %v2833 = vsel %vm2823, %v2800, %v2365
        %v2835 = vsel %vm2823, %v2802, %v2367
        %v2837 = vsel %vm2823, %v2804, %v2369
        %v2839 = vsel %vm2823, %v2806, %v2371
        %v2841 = vsel %vm2823, %v2808, %v2373
        %v2843 = vsel %vm2823, %v2810, %v2375
        %v2845 = vsel %vm2823, %v2812, %v2377
        %v2847 = vsel %vm2823, %v2814, %v2379
        %v2849 = vsel %vm2823, %v2816, %v2381
        %v2851 = vsel %vm2823, %v2818, %v2383
        %v2853 = vsel %vm2823, %v2820, %v2385
        %v2855 = vsel %vm2823, %v2822, %v2387
        %vm2856 = vcmask 162816
        %v2858 = vsel %vm2856, %v2825, %v2437
        %v2860 = vsel %vm2856, %v2827, %v2439
        %v2862 = vsel %vm2856, %v2829, %v2441
        %v2864 = vsel %vm2856, %v2831, %v2443
        %v2866 = vsel %vm2856, %v2833, %v2445
        %v2868 = vsel %vm2856, %v2835, %v2447
        %v2870 = vsel %vm2856, %v2837, %v2449
        %v2872 = vsel %vm2856, %v2839, %v2451
        %v2874 = vsel %vm2856, %v2841, %v2453
        %v2876 = vsel %vm2856, %v2843, %v2455
        %v2878 = vsel %vm2856, %v2845, %v2457
        %v2880 = vsel %vm2856, %v2847, %v2459
        %v2882 = vsel %vm2856, %v2849, %v2461
        %v2884 = vsel %vm2856, %v2851, %v2463
        %v2886 = vsel %vm2856, %v2853, %v2465
        %v2888 = vsel %vm2856, %v2855, %v2467
        %vm2889 = vcmask 195584
        %v2891 = vsel %vm2889, %v2858, %v2517
        %v2893 = vsel %vm2889, %v2860, %v2519
        %v2895 = vsel %vm2889, %v2862, %v2521
        %v2897 = vsel %vm2889, %v2864, %v2523
        %v2899 = vsel %vm2889, %v2866, %v2525
        %v2901 = vsel %vm2889, %v2868, %v2527
        %v2903 = vsel %vm2889, %v2870, %v2529
        %v2905 = vsel %vm2889, %v2872, %v2531
        %v2907 = vsel %vm2889, %v2874, %v2533
        %v2909 = vsel %vm2889, %v2876, %v2535
        %v2911 = vsel %vm2889, %v2878, %v2537
        %v2913 = vsel %vm2889, %v2880, %v2539
        %v2915 = vsel %vm2889, %v2882, %v2541
        %v2917 = vsel %vm2889, %v2884, %v2543
        %v2919 = vsel %vm2889, %v2886, %v2545
        %v2921 = vsel %vm2889, %v2888, %v2547
        %vm2922 = vcmask 228352
        %v2924 = vsel %vm2922, %v2891, %v2597
        %v2926 = vsel %vm2922, %v2893, %v2599
        %v2928 = vsel %vm2922, %v2895, %v2601
        %v2930 = vsel %vm2922, %v2897, %v2603
        %v2932 = vsel %vm2922, %v2899, %v2605
        %v2934 = vsel %vm2922, %v2901, %v2607
        %v2936 = vsel %vm2922, %v2903, %v2609
        %v2938 = vsel %vm2922, %v2905, %v2611
        %v2940 = vsel %vm2922, %v2907, %v2613
        %v2942 = vsel %vm2922, %v2909, %v2615
        %v2944 = vsel %vm2922, %v2911, %v2617
        %v2946 = vsel %vm2922, %v2913, %v2619
        %v2948 = vsel %vm2922, %v2915, %v2621
        %v2950 = vsel %vm2922, %v2917, %v2623
        %v2952 = vsel %vm2922, %v2919, %v2625
        %v2954 = vsel %vm2922, %v2921, %v2627
        %vm2955 = vcmask 261120
        %v2957 = vsel %vm2955, %v2924, %v2677
        %v2959 = vsel %vm2955, %v2926, %v2679
        %v2961 = vsel %vm2955, %v2928, %v2681
        %v2963 = vsel %vm2955, %v2930, %v2683
        %v2965 = vsel %vm2955, %v2932, %v2685
        %v2967 = vsel %vm2955, %v2934, %v2687
        %v2969 = vsel %vm2955, %v2936, %v2689
        %v2971 = vsel %vm2955, %v2938, %v2691
        %v2973 = vsel %vm2955, %v2940, %v2693
        %v2975 = vsel %vm2955, %v2942, %v2695
        %v2977 = vsel %vm2955, %v2944, %v2697
        %v2979 = vsel %vm2955, %v2946, %v2699
        %v2981 = vsel %vm2955, %v2948, %v2701
        %v2983 = vsel %vm2955, %v2950, %v2703
        %v2985 = vsel %vm2955, %v2952, %v2705
        %v2987 = vsel %vm2955, %v2954, %v2707
        %v2988 = vld [vmem:[%s1] sm:$0xf]
        %v2989 = vld [vmem:[%s1 + $0x4] sm:$0xf]
        %v2990 = vld [vmem:[%s1 + $0x8] sm:$0xf]
        %v2991 = vld [vmem:[%s1 + $0xc] sm:$0xf]
        %v2992 = vld [vmem:[%s2] sm:$0xff]
        %v2993 = vld [vmem:[%s2 + $0x8] sm:$0xff]
        %v2994 = vld [vmem:[%s2 + $0x10] sm:$0xff]
        %v2995 = vld [vmem:[%s2 + $0x18] sm:$0xff]
        %2997 = vset.pattern.permute.xlu0 0
        %2998 = vperm.xlu0 %2997, %v2992
        %v2999 = vpop.permute.xlu0 %2998
        %3002 = vset.pattern.permute.xlu0 0
        %3003 = vperm.xlu0 %3002, %v2993
        %v3004 = vpop.permute.xlu0 %3003
        %3007 = vset.pattern.permute.xlu0 0
        %3008 = vperm.xlu0 %3007, %v2994
        %v3009 = vpop.permute.xlu0 %3008
        %3012 = vset.pattern.permute.xlu0 0
        %3013 = vperm.xlu0 %3012, %v2995
        %v3014 = vpop.permute.xlu0 %3013
        %v3020 = vunpack.c.l.b16 %v2988
        %v3021 = vunpack.c.l.b16 %v2989
        %v3022 = vunpack.c.l.b16 %v2990
        %v3023 = vunpack.c.l.b16 %v2991
        %v3024 = vpack.c.b16 %v3021, %v3020
        %v3025 = vpack.c.b16 %v3023, %v3022
        %vm3026 = vcmask 293888
        %v3028 = vsel %vm3026, %v3024, 0
        %v3031 = vsel %vm3026, %v3025, 0
        %v3033 = vsel %vm3026, %v2957, 0
        %v3035 = vsel %vm3026, %v2959, 0
        %v3037 = vsel %vm3026, %v2961, 0
        %v3039 = vsel %vm3026, %v2963, 0
        %v3041 = vsel %vm3026, %v2965, 0
        %v3043 = vsel %vm3026, %v2967, 0
        %v3045 = vsel %vm3026, %v2969, 0
        %v3047 = vsel %vm3026, %v2971, 0
        %v3049 = vsel %vm3026, %v2973, 0
        %v3051 = vsel %vm3026, %v2975, 0
        %v3053 = vsel %vm3026, %v2977, 0
        %v3055 = vsel %vm3026, %v2979, 0
        %v3057 = vsel %vm3026, %v2981, 0
        %v3059 = vsel %vm3026, %v2983, 0
        %v3061 = vsel %vm3026, %v2985, 0
        %v3063 = vsel %vm3026, %v2987, 0
        %3065 = vmatprep.subr.bf16.mxu0 0
        %3066 = vmatpush1.bf16.xpose.msra.mxu0 %v3033
        %3067 = vmatprep.subr.bf16.mxu0 0
        %3068 = vmatpush1.bf16.xpose.msra.mxu0 %v3035
        %3069 = vmatprep.subr.bf16.mxu0 0
        %3070 = vmatpush1.bf16.xpose.msra.mxu0 %v3037
        %3071 = vmatprep.subr.bf16.mxu0 0
        %3072 = vmatpush1.bf16.xpose.msra.mxu0 %v3039
        %3073 = vmatprep.subr.bf16.mxu0 0
        %3074 = vmatpush1.bf16.xpose.msra.mxu0 %v3041
        %3075 = vmatprep.subr.bf16.mxu0 0
        %3076 = vmatpush1.bf16.xpose.msra.mxu0 %v3043
        %3077 = vmatprep.subr.bf16.mxu0 0
        %3078 = vmatpush1.bf16.xpose.msra.mxu0 %v3045
        %3079 = vmatprep.subr.bf16.mxu0 0
        %3080 = vmatpush1.bf16.xpose.msra.mxu0 %v3047
        %3081 = vmatprep.subr.bf16.mxu0 0
        %3082 = vmatpush1.bf16.xpose.msra.mxu0 %v3049
        %3083 = vmatprep.subr.bf16.mxu0 0
        %3084 = vmatpush1.bf16.xpose.msra.mxu0 %v3051
        %3085 = vmatprep.subr.bf16.mxu0 0
        %3086 = vmatpush1.bf16.xpose.msra.mxu0 %v3053
        %3087 = vmatprep.subr.bf16.mxu0 0
        %3088 = vmatpush1.bf16.xpose.msra.mxu0 %v3055
        %3089 = vmatprep.subr.bf16.mxu0 0
        %3090 = vmatpush1.bf16.xpose.msra.mxu0 %v3057
        %3091 = vmatprep.subr.bf16.mxu0 0
        %3092 = vmatpush1.bf16.xpose.msra.mxu0 %v3059
        %3093 = vmatprep.subr.bf16.mxu0 0
        %3094 = vmatpush1.bf16.xpose.msra.mxu0 %v3061
        %3095 = vmatprep.subr.bf16.mxu0 0
        %3096 = vmatpush1.bf16.xpose.msra.mxu0 %v3063
        %3097 = vmatprep.mubr.bf16.mxu0 0
        %3098 = vmatmul.mubr.bf16.gmra.mrb[0].mxu0 %v3028
        %v3099 = vpop.f32.mrb[0].mxu0
        %v3100 = vadd.f32 %v2999, %v3099
        %v3101 = vpop.f32.mrb[0].mxu0
        %v3102 = vadd.f32 %v2999, %v3101
        %v3103 = vpop.f32.mrb[0].mxu0
        %v3104 = vadd.f32 %v3004, %v3103
        %v3105 = vpop.f32.mrb[0].mxu0
        %v3106 = vadd.f32 %v3004, %v3105
        %3107 = vmatprep.mubr.bf16.mxu0 0
        %3108 = vmatmul.mubr.bf16.gmra.mrb[0].mxu0 %v3031
        %v3109 = vpop.f32.mrb[0].mxu0
        %v3110 = vadd.f32 %v3009, %v3109
        %v3111 = vpop.f32.mrb[0].mxu0
        %v3112 = vadd.f32 %v3009, %v3111
        %v3113 = vpop.f32.mrb[0].mxu0
        %v3114 = vadd.f32 %v3014, %v3113
        %v3115 = vpop.f32.mrb[0].mxu0
        %v3116 = vadd.f32 %v3014, %v3115
        %3117 = vdwg.mxu0
        %v3118 = vmul.f32 %v3100, %v3100
        %v3119 = vmul.f32 %v3102, %v3102
        %v3120 = vmul.f32 %v3104, %v3104
        %v3121 = vmul.f32 %v3106, %v3106
        %v3122 = vmul.f32 %v3110, %v3110
        %v3123 = vmul.f32 %v3112, %v3112
        %v3124 = vmul.f32 %v3114, %v3114
        %v3125 = vmul.f32 %v3116, %v3116
        %v3126 = vadd.f32 %v3118, %v3120
        %v3127 = vadd.f32 %v3126, %v3122
        %v3128 = vadd.f32 %v3127, %v3124
        %v3129 = vrot.slane %v3128, 4
        %v3130 = vadd.f32 %v3128, %v3129
        %v3131 = vrot.slane %v3130, 2
        %v3132 = vadd.f32 %v3130, %v3131
        %v3133 = vrot.slane %v3132, 1
        %v3134 = vadd.f32 %v3132, %v3133
        %v3135 = vadd.f32 %v3119, %v3121
        %v3136 = vadd.f32 %v3135, %v3123
        %v3137 = vadd.f32 %v3136, %v3125
        %v3138 = vrot.slane %v3137, 4
        %v3139 = vadd.f32 %v3137, %v3138
        %v3140 = vrot.slane %v3139, 2
        %v3141 = vadd.f32 %v3139, %v3140
        %v3142 = vrot.slane %v3141, 1
        %v3143 = vadd.f32 %v3141, %v3142
        %v3144 = vmax.f32 %v3134, 1e-24
        %v3145 = vmax.f32 %v3143, 1e-24
        %v3146 = vrsqrt.pop %v3144
        %v3147 = vrsqrt.pop %v3145
        %v3148 = vmul.f32 %v3100, %v3146
        %v3149 = vmul.f32 %v3102, %v3147
        %v3150 = vmul.f32 %v3104, %v3146
        %v3151 = vmul.f32 %v3106, %v3147
        %v3152 = vmul.f32 %v3110, %v3146
        %v3153 = vmul.f32 %v3112, %v3147
        %v3154 = vmul.f32 %v3114, %v3146
        %v3155 = vmul.f32 %v3116, %v3147
        %3156 = vst [vmem:[%s210] sm:$0xff] %v3100
        %3157 = vst [vmem:[%s210 + $0x8] sm:$0xff] %v3102
        %3158 = vst [vmem:[%s210 + $0x10] sm:$0xff] %v3104
        %3159 = vst [vmem:[%s210 + $0x18] sm:$0xff] %v3106
        %3160 = vst [vmem:[%s210 + $0x20] sm:$0xff] %v3110
        %3161 = vst [vmem:[%s210 + $0x28] sm:$0xff] %v3112
        %3162 = vst [vmem:[%s210 + $0x30] sm:$0xff] %v3114
        %3163 = vst [vmem:[%s210 + $0x38] sm:$0xff] %v3116
        %3164 = vst [vmem:[%s217] sm:$0xff] %v3148
        %3165 = vst [vmem:[%s217 + $0x8] sm:$0xff] %v3149
        %3166 = vst [vmem:[%s217 + $0x10] sm:$0xff] %v3150
        %3167 = vst [vmem:[%s217 + $0x18] sm:$0xff] %v3151
        %3168 = vst [vmem:[%s217 + $0x20] sm:$0xff] %v3152
        %3169 = vst [vmem:[%s217 + $0x28] sm:$0xff] %v3153
        %3170 = vst [vmem:[%s217 + $0x30] sm:$0xff] %v3154
        %3171 = vst [vmem:[%s217 + $0x38] sm:$0xff] %v3155
        %s3172 = sand.u32 %s112, 1
        %s3173 = scalar_lea.sflag [#allocation3], %s3172
        %s3174 = sand.u32 %s112, 1
        %s3175 = smul.addr %s3174, 64
        %s3176 = scalar_lea.vmem [#allocation2], %s3175
        %s3177 = sand.u32 %s140, 1
        %s3178 = scalar_lea.sflag [#allocation5], %s3177
        %s3179 = sand.u32 %s140, 1
        %s3180 = smul.addr %s3179, 64
        %s3181 = scalar_lea.vmem [#allocation4], %s3180
        // Predicated region
        $region33: #{tpu_custom_call.1} parent=31 // pred_check
          %p3182 = pneg %p122
        $region34: #{tpu_custom_call.1} parent=31 // pred_check_branch
          %3184 = sbr.rel (%p3182) target = $region36
        $region35: #{tpu_custom_call.1} parent=31 // pred_region
          %s3185 = smul.u32 2, %s27
          %s3187 = ssub.s32 1024, 1024
          %3188 = vsyncadd %s3173, %s3187
          %s3189 = smul.addr %s26, 8
          %s3190 = sadd.s32 %s3185, %s3189
          %s3191 = smul.addr %s3190, 128
          %s3192 = scalar_lea.hbm %s3, %s3191
          %s3193 = sshll.u32 %s3176, 4
          %s3194 = int_to_ptr.vmem [resolvable:$true] %s3193
          %3199 = dma.vmem_to_hbm [thread:$0]  %s3194, 1024, %s3192, %s3173, 256, 256, 16
        $region36: #{tpu_custom_call.1} parent=31 // pred_fallthru
          _
        // Predicated region
        $region37: #{tpu_custom_call.1} parent=31 // pred_check
          %p3200 = pneg %p150
        $region38: #{tpu_custom_call.1} parent=31 // pred_check_branch
          %3202 = sbr.rel (%p3200) target = $region40
        $region39: #{tpu_custom_call.1} parent=31 // pred_region
          %s3203 = smul.u32 2, %s27
          %s3205 = ssub.s32 1024, 1024
          %3206 = vsyncadd %s3178, %s3205
          %s3207 = smul.addr %s26, 8
          %s3208 = sadd.s32 %s3203, %s3207
          %s3209 = smul.addr %s3208, 128
          %s3210 = scalar_lea.hbm %s4, %s3209
          %s3211 = sshll.u32 %s3181, 4
          %s3212 = int_to_ptr.vmem [resolvable:$true] %s3211
          %3217 = dma.vmem_to_hbm [thread:$0]  %s3212, 1024, %s3210, %s3178, 256, 256, 16
        $region40: #{tpu_custom_call.1} parent=31 // pred_fallthru
          _
      $region32: #{tpu_custom_call.1} parent=5 // pred_fallthru
        _
      %p3218 = scmp.le.s32.totalorder 2, %s17
      // Predicated region
      $region41: #{tpu_custom_call.1} parent=5 // pred_check
        %p3219 = pneg %p3218
      $region42: #{tpu_custom_call.1} parent=5 // pred_check_branch
        %3221 = sbr.rel (%p3219) target = $region44
      $region43: #{tpu_custom_call.1} parent=5 // pred_region
        %s3222 = ssub.s32 %s17, 2
        // Predicated region
        $region45: #{tpu_custom_call.1} parent=43 // pred_check
          %p3223 = pneg %p128
        $region46: #{tpu_custom_call.1} parent=43 // pred_check_branch
          %3225 = sbr.rel (%p3223) target = $region48
        $region47: #{tpu_custom_call.1} parent=43 // pred_region
          %s3226 = sand.u32 %s113, 1
          %s3227 = scalar_lea.sflag [#allocation3], %s3226
          %s3228 = sand.u32 %s113, 1
          %s3229 = smul.addr %s3228, 64
          %s3230 = scalar_lea.vmem [#allocation2], %s3229
          %3231 = dma.done %s3227, 1024
        $region48: #{tpu_custom_call.1} parent=43 // pred_fallthru
          _
        // Predicated region
        $region49: #{tpu_custom_call.1} parent=43 // pred_check
          %p3232 = pneg %p156
        $region50: #{tpu_custom_call.1} parent=43 // pred_check_branch
          %3234 = sbr.rel (%p3232) target = $region52
        $region51: #{tpu_custom_call.1} parent=43 // pred_region
          %s3235 = sand.u32 %s141, 1
          %s3236 = scalar_lea.sflag [#allocation5], %s3235
          %s3237 = sand.u32 %s141, 1
          %s3238 = smul.addr %s3237, 64
          %s3239 = scalar_lea.vmem [#allocation4], %s3238
          %3240 = dma.done %s3236, 1024
        $region52: #{tpu_custom_call.1} parent=43 // pred_fallthru
          _
      $region44: #{tpu_custom_call.1} parent=5 // pred_fallthru
        _
    $region6: #{tpu_custom_call.1} parent=1 // loop_footer
      %s21 = sadd.s32 1, %s17
    $region7: #{tpu_custom_call.1} parent=1 // loop_footer_branch
      %16 = sbr.rel target = $region3
    $region8: #{tpu_custom_call.1} parent=1 // loop_exit
      _
    %3241 = vsyncpa [#allocation3], 1
    %s3242 = scalar_lea.sflag [#allocation3], 1
    %3243 = vsyncpa %s3242, 1
    %3244 = vsyncpa [#allocation5], 1
    %s3245 = scalar_lea.sflag [#allocation5], 1
    %3246 = vsyncpa %s3245, 1

</llo_original>
